<compile_context>
chip_gen: v7x
topology: tpu7x:2x2x1
jax: 0.10.0
libtpu: 0.0.40
codegen_flags: <defaults>
</compile_context>

<pallas_src>
import functools

import jax
import jax.numpy as jnp
from jax.experimental import pallas as pl
from jax.experimental.pallas import tpu as pltpu

ALPHA = 10.0          # depth_si_loss alpha
LAMBDA_SCALE = 0.85   # depth_si_loss lambda_scale
EPS_SI = 1e-5         # depth_si_loss eps
EPS_GRAD = 1e-3       # gradient_loss_v2 eps
DEFAULT_TILE_H = 512  # target full-res rows per grid step (review: 512-1024 on v5e/v6e)


def _cdiv(a, b):
    return -(-a // b)


def _round_up(x, m):
    return _cdiv(x, m) * m


@functools.lru_cache(maxsize=None)
def _vmem_capacity_bytes():
    """Physical VMEM of the local TPU generation (fallback: 128 MiB = v5e/v6e)."""
    try:
        info = pltpu.get_tpu_info()
        for attr in ("vmem_capacity_bytes", "vmem_bytes", "vmem_size_bytes"):
            v = getattr(info, attr, None)
            if v:
                return int(v)
    except Exception:
        pass
    return 128 << 20


def _choose_h_tiling(h, tile_h):
    """Return (n_tiles, th, h_pad) with th % 8 == 0 (or th == h), preferring h_pad == h."""
    tile_h = max(int(tile_h), 8)
    if h <= tile_h:
        return 1, h, h                      # single tile: block spans the full height, no pad
    base = _cdiv(h, tile_h)
    if h % 8 == 0:
        # Prefer an exact division -> no jnp.pad copy of the full-res planes.
        for n in range(base, min(4 * base, h // 8) + 1):
            if h % n == 0 and (h // n) % 8 == 0:
                return n, h // n, h
    n = base
    th = _round_up(_cdiv(h, n), 8)
    return n, th, th * n


def _pad_plane(x, pad_value, rows_to, cols_mult=128):
    """Pad a (B, h, w) plane: rows up to `rows_to`, cols to a multiple of `cols_mult`.

    Mask-safe padding: gt planes padded with 0 (invalid -> excluded from every masked
    sum and valid count), pred planes with `pad_value` (killed by the 0 mask).
    """
    _, h, w = x.shape
    hp = max(int(rows_to), h)
    wp = _round_up(max(w, cols_mult), cols_mult)
    if hp == h and wp == w:
        return x
    return jnp.pad(x, ((0, 0), (0, hp - h), (0, wp - w)), constant_values=pad_value)


def _make_kernel(n_tiles):
    """Build the kernel for a static number of H tiles.

    Grid = (batch, n_tiles).  The t axis (axis 1) must remain the inner, sequentially
    executed axis per core (batch is the "parallel" megacore axis).

    SMEM accumulator layout (per image):
      [0] valid count, scale 0            [1] sum(diff^2)           [2] sum(diff)
      [3] grad sum, scale 0 (undivided)   [4] grad of scales 2..3 (already divided)
      [5] valid count, scale 1 (stride 2) [6] grad sum, scale 1 (undivided)
    """
    last_t = n_tiles - 1

    def _masked_grad_sum(ld, v):
        """sum |ld[i,:]-ld[i+2,:]|*v[i]*v[i+2] + sum |ld[:,j]-ld[:,j+2]|*v[:,j]*v[:,j+2]."""
        # NOTE(v7x follow-up): these +/-2 static slices could become pltpu.roll + edge
        # masks (XLU instead of ld/st + VALU copies) once the lane dim is padded to a
        # multiple of 128; kept as slices since the kernel is HBM-bound on v5e/v6e.
        total = jnp.float32(0.0)
        if ld.shape[0] > 2:
            total = total + jnp.sum(
                jnp.abs(ld[:-2, :] - ld[2:, :]) * (v[:-2, :] * v[2:, :]))
        if ld.shape[1] > 2:
            total = total + jnp.sum(
                jnp.abs(ld[:, :-2] - ld[:, 2:]) * (v[:, :-2] * v[:, 2:]))
        return total

    def kernel(p0_ref, g0_ref, p1_ref, g1_ref, p2_ref, g2_ref, p3_ref, g3_ref,
               out_ref, acc_ref, ld0c_ref, v0c_ref, ld1c_ref, v1c_ref):
        t = pl.program_id(1)
        f32 = jnp.float32

        # ---- first tile of an image: reset the per-image accumulators ----
        @pl.when(t == 0)
        def _():
            for i in range(7):
                acc_ref[i] = f32(0.0)

        # ---- tiny stride-4 / stride-6 scales: one per early grid step (load balance) ----
        for s, (pr_ref, gr_ref) in enumerate(((p2_ref, g2_ref), (p3_ref, g3_ref))):
            @pl.when(t == min(s + 1, last_t))
            def _(pr_ref=pr_ref, gr_ref=gr_ref):
                ps = pr_ref[0]
                gs = gr_ref[0]
                vs = (gs > 0.0).astype(f32)
                nvs = jnp.maximum(jnp.sum(vs), f32(1.0))
                lds = (jnp.log(ps + EPS_GRAD) - jnp.log(gs + EPS_GRAD)) * vs
                acc_ref[4] = acc_ref[4] + _masked_grad_sum(lds, vs) / nvs

        # ---- full-resolution H tile: fused SI (Eigen) + scale-0 gradient term ----
        p = p0_ref[0]                               # (TH, W)
        g = g0_ref[0]
        v = (g > 0.0).astype(f32)                   # shared validity mask / count
        diff = (jnp.log(jnp.maximum(p, EPS_SI)) -
                jnp.log(jnp.maximum(g, EPS_SI))) * v
        ld = (jnp.log(p + EPS_GRAD) - jnp.log(g + EPS_GRAD)) * v

        # ---- stride-2 H tile (tiled alongside the full-res plane) ----
        p1 = p1_ref[0]                              # (TH2, W2p)
        g1 = g1_ref[0]
        v1 = (g1 > 0.0).astype(f32)
        ld1 = (jnp.log(p1 + EPS_GRAD) - jnp.log(g1 + EPS_GRAD)) * v1

        if n_tiles > 1:
            # vertical pairs straddling the previous tile boundary (exact, no halo re-DMA)
            @pl.when(t > 0)
            def _():
                seam0 = jnp.abs(ld0c_ref[...] - ld[0:2, :]) * (v0c_ref[...] * v[0:2, :])
                seam1 = jnp.abs(ld1c_ref[...] - ld1[0:2, :]) * (v1c_ref[...] * v1[0:2, :])
                acc_ref[3] = acc_ref[3] + jnp.sum(seam0)
                acc_ref[6] = acc_ref[6] + jnp.sum(seam1)
            # carry each plane's last two rows for the next tile of the same image
            th = ld.shape[0]
            ld0c_ref[...] = ld[th - 2:th, :]
            v0c_ref[...] = v[th - 2:th, :]
            th2 = ld1.shape[0]
            ld1c_ref[...] = ld1[th2 - 2:th2, :]
            v1c_ref[...] = v1[th2 - 2:th2, :]

        acc_ref[0] = acc_ref[0] + jnp.sum(v)
        acc_ref[1] = acc_ref[1] + jnp.sum(diff * diff)
        acc_ref[2] = acc_ref[2] + jnp.sum(diff)
        acc_ref[3] = acc_ref[3] + _masked_grad_sum(ld, v)
        acc_ref[5] = acc_ref[5] + jnp.sum(v1)
        acc_ref[6] = acc_ref[6] + _masked_grad_sum(ld1, v1)

        # ---- last tile: finalize the two per-image values (lane-dense output) ----
        @pl.when(t == last_t)
        def _():
            nv0 = jnp.maximum(acc_ref[0], f32(1.0))
            nv1 = jnp.maximum(acc_ref[5], f32(1.0))
            diff_mean = acc_ref[1] / nv0
            diff_var = (acc_ref[2] * acc_ref[2]) / (nv0 * nv0)
            si_arg = diff_mean - LAMBDA_SCALE * diff_var
            grad_total = acc_ref[3] / nv0 + acc_ref[6] / nv1 + acc_ref[4]
            lane = jax.lax.broadcasted_iota(jnp.int32, out_ref.shape, 2)
            out_ref[...] = jnp.where(lane == 0, si_arg,
                                     jnp.where(lane == 1, grad_total, f32(0.0)))

    return kernel


@functools.partial(jax.jit, static_argnames=("weight_sig", "weight_grad", "tile_h"))
def depth_loss_v3(pred, target, weight_sig=10.0, weight_grad=0.5,
                  tile_h=DEFAULT_TILE_H):
    """Forward pass of DepthLossV3 (max_depth is unused by the torch forward)."""
    if pred.ndim == 4:
        pred = pred[:, 0]          # torch code squeezes channel dim 1 (C == 1)
        target = target[:, 0]
    pred = pred.astype(jnp.float32)
    target = target.astype(jnp.float32)
    B, H, W = pred.shape

    # -------- downsample glue: stride-2 once; stride-4/6 derived from the stride-2 plane --------
    p1 = pred[:, ::2, ::2]
    g1 = target[:, ::2, ::2]
    p2s = p1[:, ::2, ::2]          # == pred[:, ::4, ::4]
    g2s = g1[:, ::2, ::2]
    p3s = p1[:, ::3, ::3]          # == pred[:, ::6, ::6]
    g3s = g1[:, ::3, ::3]
    H2, W2 = p1.shape[1], p1.shape[2]

    # stride-4/6 planes: rows to x8, width to x128, mask-safe pad (pred=1, gt=0)
    small_planes = [
        _pad_plane(p2s, 1.0, rows_to=_round_up(max(p2s.shape[1], 8), 8)),
        _pad_plane(g2s, 0.0, rows_to=_round_up(max(g2s.shape[1], 8), 8)),
        _pad_plane(p3s, 1.0, rows_to=_round_up(max(p3s.shape[1], 8), 8)),
        _pad_plane(g3s, 0.0, rows_to=_round_up(max(g3s.shape[1], 8), 8)),
    ]
    elems_small = sum(a.shape[1] * a.shape[2] for a in small_planes)

    # -------- generation-aware VMEM plan: shrink tile_h until the working set fits --------
    vmem_cap = _vmem_capacity_bytes()
    budget = max((vmem_cap * 4) // 5, 24 << 20)   # ~51 MiB on v7x, ~102 MiB on v5e/v6e

    cand, t_ = [], max(int(tile_h), 8)
    while True:
        cand.append(t_)
        if t_ <= 8:
            break
        t_ = max(8, t_ // 2)

    for t_ in cand:
        n_tiles, th, h_pad = _choose_h_tiling(H, t_)
        th2 = H2 if n_tiles == 1 else _round_up(_cdiv(H2, n_tiles), 8)
        w2p = _round_up(max(W2, 128), 128)
        vmem_need = (16 * th * W              # full-res pred+gt, double-buffered
                     + 16 * th2 * w2p         # stride-2 pred+gt, double-buffered
                     + 8 * elems_small        # stride-4/6 planes, double-buffered
                     + 16 * (W + w2p)         # seam-carry scratch
                     + (4 << 20))             # headroom for internal scratch
        if vmem_need <= budget:
            break
    vmem_limit = int(min(max(vmem_need, 32 << 20), (vmem_cap * 9) // 10))

    # -------- full-res plane: row pad only when no exact (x8) tiling exists --------
    if h_pad == H:
        p0, g0 = pred, target
    else:
        p0 = jnp.pad(pred, ((0, 0), (0, h_pad - H), (0, 0)), constant_values=1.0)
        g0 = jnp.pad(target, ((0, 0), (0, h_pad - H), (0, 0)), constant_values=0.0)

    # stride-2 plane: rows padded to th2*n_tiles, width to x128 (mask-safe)
    h2_pad = th2 * n_tiles
    p1p = _pad_plane(p1, 1.0, rows_to=h2_pad)
    g1p = _pad_plane(g1, 0.0, rows_to=h2_pad)

    tiled_map = lambda b, t: (b, t, 0)
    whole_map = lambda b, t: (b, 0, 0)
    in_specs = [
        pl.BlockSpec((1, th, W), tiled_map),          # pred, full-res H tile
        pl.BlockSpec((1, th, W), tiled_map),          # gt,   full-res H tile
        pl.BlockSpec((1, th2, w2p), tiled_map),       # pred, stride-2 H tile
        pl.BlockSpec((1, th2, w2p), tiled_map),       # gt,   stride-2 H tile
    ]
    in_specs += [pl.BlockSpec((1,) + a.shape[1:], whole_map) for a in small_planes]
    out_specs = pl.BlockSpec((1, 1, 128), whole_map)

    e0 = h_pad * W
    e1 = h2_pad * w2p
    e_small = elems_small // 2
    cost = pl.CostEstimate(
        flops=int(30 * B * (e0 + e1 + e_small)),
        transcendentals=int(B * (4 * e0 + 2 * (e1 + e_small))),
        bytes_accessed=int(8 * B * (e0 + e1 + e_small) + B * 512),
    )

    out = pl.pallas_call(
        _make_kernel(n_tiles),
        out_shape=jax.ShapeDtypeStruct((B, 1, 128), jnp.float32),
        grid=(B, n_tiles),
        in_specs=in_specs,
        out_specs=out_specs,
        scratch_shapes=[
            pltpu.SMEM((8,), jnp.float32),        # per-image scalar accumulators
            pltpu.VMEM((2, W), jnp.float32),      # scale-0 log-diff seam carry
            pltpu.VMEM((2, W), jnp.float32),      # scale-0 validity seam carry
            pltpu.VMEM((2, w2p), jnp.float32),    # scale-1 log-diff seam carry
            pltpu.VMEM((2, w2p), jnp.float32),    # scale-1 validity seam carry
        ],
        compiler_params=pltpu.CompilerParams(
            dimension_semantics=("parallel", "arbitrary"),
            vmem_limit_bytes=vmem_limit,
        ),
        cost_estimate=cost,
    )(p0, g0, p1p, g1p, *small_planes)

    # tiny scalar epilogue: per-image sqrt + batch means + loss weights
    si_arg = jnp.maximum(out[:, 0, 0], 0.0)   # clamp guards f32-rounding negatives
    grad_per_img = out[:, 0, 1]
    loss_s = weight_sig * (ALPHA * jnp.mean(jnp.sqrt(si_arg)))
    loss_g = weight_grad * jnp.mean(grad_per_img)
    loss = loss_s + loss_g
    return loss, {"loss_s": loss_s, "loss_g": loss_g}


# ---------------- pure-JAX reference (mirrors the torch code) ----------------
def _ref_depth_si_loss(depth_pr, depth_gt, alpha=10.0, lam=0.85, eps=1e-5):
    valid = (depth_gt > 0).astype(jnp.float32)
    num_valid = jnp.maximum(valid.sum(axis=(-1, -2)), 1.0)
    lp = jnp.log(jnp.maximum(depth_pr, eps))
    lg = jnp.log(jnp.maximum(depth_gt, eps))
    diff = (lp - lg) * valid
    diff_mean = (diff ** 2).sum(axis=(-2, -1)) / num_valid
    diff_var = diff.sum(axis=(-2, -1)) ** 2 / num_valid ** 2
    return alpha * jnp.mean(jnp.sqrt(diff_mean - lam * diff_var))


def _ref_gradient_loss_v2(depth_pr, depth_gt, eps=1e-3):
    if depth_gt.ndim == 4:
        depth_pr = depth_pr[:, 0]
        depth_gt = depth_gt[:, 0]
    prs = [depth_pr] + [depth_pr[:, ::2 * i, ::2 * i] for i in range(1, 4)]
    gts = [depth_gt] + [depth_gt[:, ::2 * i, ::2 * i] for i in range(1, 4)]
    total = 0.0
    for p, g in zip(prs, gts):
        v = (g > 0).astype(jnp.float32)
        nv = jnp.maximum(v.sum(axis=(-1, -2)), 1.0)
        ld = (jnp.log(p + eps) - jnp.log(g + eps)) * v
        vg = jnp.abs(ld[:, :-2, :] - ld[:, 2:, :]) * v[:, :-2, :] * v[:, 2:, :]
        hg = jnp.abs(ld[:, :, :-2] - ld[:, :, 2:]) * v[:, :, :-2] * v[:, :, 2:]
        total = total + (hg.sum(axis=(-1, -2)) + vg.sum(axis=(-1, -2))) / nv
    return total.mean()


if __name__ == "__main__":
    key = jax.random.PRNGKey(0)
    kp, kt, km = jax.random.split(key, 3)
    B, C, H, W = 2, 1, 16, 16
    max_depth = 10.0

    pred = jax.random.uniform(kp, (B, C, H, W), jnp.float32, 0.1, max_depth)
    target = jax.random.uniform(kt, (B, C, H, W), jnp.float32, 0.1, max_depth)
    # zero out a few ground-truth pixels to exercise the validity mask
    mask = jax.random.uniform(km, (B, C, H, W)) > 0.15
    target = jnp.where(mask, target, 0.0)

    # reference (same math as the torch module)
    ref_s = 10.0 * _ref_depth_si_loss(pred, target)
    ref_g = 0.5 * _ref_gradient_loss_v2(pred, target)
    ref = ref_s + ref_g

    # single-H-tile path (default tile_h covers the whole image)
    loss, parts = depth_loss_v3(pred, target)
    jax.block_until_ready(loss)
    assert jnp.allclose(loss, ref, rtol=1e-3, atol=1e-4), (float(loss), float(ref))
    assert jnp.allclose(parts["loss_s"], ref_s, rtol=1e-3, atol=1e-4)
    assert jnp.allclose(parts["loss_g"], ref_g, rtol=1e-3, atol=1e-4)

    # multi-H-tile path (exercises the accumulators + both cross-tile seam carries)
    loss2, _ = depth_loss_v3(pred, target, tile_h=8)
    jax.block_until_ready(loss2)
    assert jnp.allclose(loss2, ref, rtol=1e-3, atol=1e-4), (float(loss2), float(ref))

    print("KERNEL_OK")
</pallas_src>

<mosaic_0001>
module attributes {stable_mosaic.version = 11 : i64} {
  func.func @kernel(%arg0: i32, %arg1: i32, %arg2: memref<1x16x16xf32, #tpu.memory_space<vmem>>, %arg3: memref<1x16x16xf32, #tpu.memory_space<vmem>>, %arg4: memref<1x8x128xf32, #tpu.memory_space<vmem>>, %arg5: memref<1x8x128xf32, #tpu.memory_space<vmem>>, %arg6: memref<1x8x128xf32, #tpu.memory_space<vmem>>, %arg7: memref<1x8x128xf32, #tpu.memory_space<vmem>>, %arg8: memref<1x8x128xf32, #tpu.memory_space<vmem>>, %arg9: memref<1x8x128xf32, #tpu.memory_space<vmem>>, %arg10: memref<1x1x128xf32, #tpu.memory_space<vmem>>, %arg11: memref<8xf32, #tpu.memory_space<smem>>, %arg12: memref<2x16xf32, #tpu.memory_space<vmem>>, %arg13: memref<2x16xf32, #tpu.memory_space<vmem>>, %arg14: memref<2x128xf32, #tpu.memory_space<vmem>>, %arg15: memref<2x128xf32, #tpu.memory_space<vmem>>) attributes {dimension_semantics = [#tpu.dimension_semantics<parallel>, #tpu.dimension_semantics<arbitrary>], iteration_bounds = array<i64: 2, 1>, scalar_prefetch = 0 : i64, scratch_operands = 5 : i64, tpu.core_type = #tpu.core_type<tc>, window_params = [{transform_indices = @transform_0, window_bounds = array<i64: 1, 16, 16>}, {transform_indices = @transform_1, window_bounds = array<i64: 1, 16, 16>}, {transform_indices = @transform_2, window_bounds = array<i64: 1, 8, 128>}, {transform_indices = @transform_3, window_bounds = array<i64: 1, 8, 128>}, {transform_indices = @transform_4, window_bounds = array<i64: 1, 8, 128>}, {transform_indices = @transform_5, window_bounds = array<i64: 1, 8, 128>}, {transform_indices = @transform_6, window_bounds = array<i64: 1, 8, 128>}, {transform_indices = @transform_7, window_bounds = array<i64: 1, 8, 128>}, {transform_indices = @transform_8, window_bounds = array<i64: 1, 1, 128>}]} {
    %c0_i32 = arith.constant 0 : i32
    %0 = arith.cmpi eq, %arg1, %c0_i32 : i32
    %1 = arith.extui %0 : i1 to i32
    %c0_i32_0 = arith.constant 0 : i32
    %2 = arith.cmpi ne, %1, %c0_i32_0 : i32
    scf.if %2 {
      %cst_42 = arith.constant 0.000000e+00 : f32
      %c0_43 = arith.constant 0 : index
      %139 = memref.load %arg11[%c0_43] : memref<8xf32, #tpu.memory_space<smem>>
      memref.store %cst_42, %arg11[%c0_43] : memref<8xf32, #tpu.memory_space<smem>>
      %cst_44 = arith.constant 0.000000e+00 : f32
      %c1_45 = arith.constant 1 : index
      %140 = memref.load %arg11[%c1_45] : memref<8xf32, #tpu.memory_space<smem>>
      memref.store %cst_44, %arg11[%c1_45] : memref<8xf32, #tpu.memory_space<smem>>
      %cst_46 = arith.constant 0.000000e+00 : f32
      %c2_47 = arith.constant 2 : index
      %141 = memref.load %arg11[%c2_47] : memref<8xf32, #tpu.memory_space<smem>>
      memref.store %cst_46, %arg11[%c2_47] : memref<8xf32, #tpu.memory_space<smem>>
      %cst_48 = arith.constant 0.000000e+00 : f32
      %c3_49 = arith.constant 3 : index
      %142 = memref.load %arg11[%c3_49] : memref<8xf32, #tpu.memory_space<smem>>
      memref.store %cst_48, %arg11[%c3_49] : memref<8xf32, #tpu.memory_space<smem>>
      %cst_50 = arith.constant 0.000000e+00 : f32
      %c4 = arith.constant 4 : index
      %143 = memref.load %arg11[%c4] : memref<8xf32, #tpu.memory_space<smem>>
      memref.store %cst_50, %arg11[%c4] : memref<8xf32, #tpu.memory_space<smem>>
      %cst_51 = arith.constant 0.000000e+00 : f32
      %c5_52 = arith.constant 5 : index
      %144 = memref.load %arg11[%c5_52] : memref<8xf32, #tpu.memory_space<smem>>
      memref.store %cst_51, %arg11[%c5_52] : memref<8xf32, #tpu.memory_space<smem>>
      %cst_53 = arith.constant 0.000000e+00 : f32
      %c6_54 = arith.constant 6 : index
      %145 = memref.load %arg11[%c6_54] : memref<8xf32, #tpu.memory_space<smem>>
      memref.store %cst_53, %arg11[%c6_54] : memref<8xf32, #tpu.memory_space<smem>>
    } else {
    }
    %c0_i32_1 = arith.constant 0 : i32
    %3 = arith.cmpi eq, %arg1, %c0_i32_1 : i32
    %4 = arith.extui %3 : i1 to i32
    %c0_i32_2 = arith.constant 0 : i32
    %5 = arith.cmpi ne, %4, %c0_i32_2 : i32
    scf.if %5 {
      %c0_42 = arith.constant 0 : index
      %c0_43 = arith.constant 0 : index
      %c0_44 = arith.constant 0 : index
      %139 = vector.load %arg6[%c0_42, %c0_43, %c0_44] : memref<1x8x128xf32, #tpu.memory_space<vmem>>, vector<1x8x128xf32>
      %140 = vector.shape_cast %139 : vector<1x8x128xf32> to vector<8x128xf32>
      %c0_45 = arith.constant 0 : index
      %c0_46 = arith.constant 0 : index
      %c0_47 = arith.constant 0 : index
      %141 = vector.load %arg7[%c0_45, %c0_46, %c0_47] : memref<1x8x128xf32, #tpu.memory_space<vmem>>, vector<1x8x128xf32>
      %142 = vector.shape_cast %141 : vector<1x8x128xf32> to vector<8x128xf32>
      %cst_48 = arith.constant 0.000000e+00 : f32
      %143 = vector.broadcast %cst_48 : f32 to vector<8x128xf32>
      %144 = arith.cmpf ogt, %142, %143 : vector<8x128xf32>
      %145 = arith.extui %144 : vector<8x128xi1> to vector<8x128xi32>
      %146 = arith.sitofp %145 : vector<8x128xi32> to vector<8x128xf32>
      %147 = vector.shape_cast %146 : vector<8x128xf32> to vector<1x8x128xf32>
      %cst_49 = arith.constant dense<0.000000e+00> : vector<1xf32>
      %148 = vector.multi_reduction <add>, %147, %cst_49 [1, 2] : vector<1x8x128xf32> to vector<1xf32>
      %149 = vector.shape_cast %148 : vector<1xf32> to vector<1x1x1xf32>
      %150 = vector.extract %149[0, 0, 0] : f32 from vector<1x1x1xf32>
      %cst_50 = arith.constant 1.000000e+00 : f32
      %151 = arith.maximumf %150, %cst_50 : f32
      %cst_51 = arith.constant 1.000000e-03 : f32
      %152 = vector.broadcast %cst_51 : f32 to vector<8x128xf32>
      %153 = arith.addf %140, %152 : vector<8x128xf32>
      %154 = math.log %153 : vector<8x128xf32>
      %cst_52 = arith.constant 1.000000e-03 : f32
      %155 = vector.broadcast %cst_52 : f32 to vector<8x128xf32>
      %156 = arith.addf %142, %155 : vector<8x128xf32>
      %157 = math.log %156 : vector<8x128xf32>
      %158 = arith.subf %154, %157 : vector<8x128xf32>
      %159 = arith.mulf %158, %146 : vector<8x128xf32>
      %c4 = arith.constant 4 : index
      %160 = memref.load %arg11[%c4] : memref<8xf32, #tpu.memory_space<smem>>
      %161 = vector.extract_strided_slice %159 {offsets = [0, 0], sizes = [6, 128], strides = [1, 1]} : vector<8x128xf32> to vector<6x128xf32>
      %162 = vector.extract_strided_slice %159 {offsets = [2, 0], sizes = [6, 128], strides = [1, 1]} : vector<8x128xf32> to vector<6x128xf32>
      %163 = arith.subf %161, %162 : vector<6x128xf32>
      %164 = math.absf %163 : vector<6x128xf32>
      %165 = vector.extract_strided_slice %146 {offsets = [0, 0], sizes = [6, 128], strides = [1, 1]} : vector<8x128xf32> to vector<6x128xf32>
      %166 = vector.extract_strided_slice %146 {offsets = [2, 0], sizes = [6, 128], strides = [1, 1]} : vector<8x128xf32> to vector<6x128xf32>
      %167 = arith.mulf %165, %166 : vector<6x128xf32>
      %168 = arith.mulf %164, %167 : vector<6x128xf32>
      %169 = vector.shape_cast %168 : vector<6x128xf32> to vector<1x6x128xf32>
      %cst_53 = arith.constant dense<0.000000e+00> : vector<1xf32>
      %170 = vector.multi_reduction <add>, %169, %cst_53 [1, 2] : vector<1x6x128xf32> to vector<1xf32>
      %171 = vector.shape_cast %170 : vector<1xf32> to vector<1x1x1xf32>
      %172 = vector.extract %171[0, 0, 0] : f32 from vector<1x1x1xf32>
      %cst_54 = arith.constant 0.000000e+00 : f32
      %173 = arith.addf %cst_54, %172 : f32
      %174 = vector.extract_strided_slice %159 {offsets = [0, 0], sizes = [8, 126], strides = [1, 1]} : vector<8x128xf32> to vector<8x126xf32>
      %175 = vector.extract_strided_slice %159 {offsets = [0, 2], sizes = [8, 126], strides = [1, 1]} : vector<8x128xf32> to vector<8x126xf32>
      %176 = arith.subf %174, %175 : vector<8x126xf32>
      %177 = math.absf %176 : vector<8x126xf32>
      %178 = vector.extract_strided_slice %146 {offsets = [0, 0], sizes = [8, 126], strides = [1, 1]} : vector<8x128xf32> to vector<8x126xf32>
      %179 = vector.extract_strided_slice %146 {offsets = [0, 2], sizes = [8, 126], strides = [1, 1]} : vector<8x128xf32> to vector<8x126xf32>
      %180 = arith.mulf %178, %179 : vector<8x126xf32>
      %181 = arith.mulf %177, %180 : vector<8x126xf32>
      %182 = vector.shape_cast %181 : vector<8x126xf32> to vector<1x8x126xf32>
      %cst_55 = arith.constant dense<0.000000e+00> : vector<1xf32>
      %183 = vector.multi_reduction <add>, %182, %cst_55 [1, 2] : vector<1x8x126xf32> to vector<1xf32>
      %184 = vector.shape_cast %183 : vector<1xf32> to vector<1x1x1xf32>
      %185 = vector.extract %184[0, 0, 0] : f32 from vector<1x1x1xf32>
      %186 = arith.addf %173, %185 : f32
      %187 = arith.divf %186, %151 : f32
      %188 = arith.addf %160, %187 : f32
      %c4_56 = arith.constant 4 : index
      %189 = memref.load %arg11[%c4_56] : memref<8xf32, #tpu.memory_space<smem>>
      memref.store %188, %arg11[%c4_56] : memref<8xf32, #tpu.memory_space<smem>>
    } else {
    }
    %c0_i32_3 = arith.constant 0 : i32
    %6 = arith.cmpi eq, %arg1, %c0_i32_3 : i32
    %7 = arith.extui %6 : i1 to i32
    %c0_i32_4 = arith.constant 0 : i32
    %8 = arith.cmpi ne, %7, %c0_i32_4 : i32
    scf.if %8 {
      %c0_42 = arith.constant 0 : index
      %c0_43 = arith.constant 0 : index
      %c0_44 = arith.constant 0 : index
      %139 = vector.load %arg8[%c0_42, %c0_43, %c0_44] : memref<1x8x128xf32, #tpu.memory_space<vmem>>, vector<1x8x128xf32>
      %140 = vector.shape_cast %139 : vector<1x8x128xf32> to vector<8x128xf32>
      %c0_45 = arith.constant 0 : index
      %c0_46 = arith.constant 0 : index
      %c0_47 = arith.constant 0 : index
      %141 = vector.load %arg9[%c0_45, %c0_46, %c0_47] : memref<1x8x128xf32, #tpu.memory_space<vmem>>, vector<1x8x128xf32>
      %142 = vector.shape_cast %141 : vector<1x8x128xf32> to vector<8x128xf32>
      %cst_48 = arith.constant 0.000000e+00 : f32
      %143 = vector.broadcast %cst_48 : f32 to vector<8x128xf32>
      %144 = arith.cmpf ogt, %142, %143 : vector<8x128xf32>
      %145 = arith.extui %144 : vector<8x128xi1> to vector<8x128xi32>
      %146 = arith.sitofp %145 : vector<8x128xi32> to vector<8x128xf32>
      %147 = vector.shape_cast %146 : vector<8x128xf32> to vector<1x8x128xf32>
      %cst_49 = arith.constant dense<0.000000e+00> : vector<1xf32>
      %148 = vector.multi_reduction <add>, %147, %cst_49 [1, 2] : vector<1x8x128xf32> to vector<1xf32>
      %149 = vector.shape_cast %148 : vector<1xf32> to vector<1x1x1xf32>
      %150 = vector.extract %149[0, 0, 0] : f32 from vector<1x1x1xf32>
      %cst_50 = arith.constant 1.000000e+00 : f32
      %151 = arith.maximumf %150, %cst_50 : f32
      %cst_51 = arith.constant 1.000000e-03 : f32
      %152 = vector.broadcast %cst_51 : f32 to vector<8x128xf32>
      %153 = arith.addf %140, %152 : vector<8x128xf32>
      %154 = math.log %153 : vector<8x128xf32>
      %cst_52 = arith.constant 1.000000e-03 : f32
      %155 = vector.broadcast %cst_52 : f32 to vector<8x128xf32>
      %156 = arith.addf %142, %155 : vector<8x128xf32>
      %157 = math.log %156 : vector<8x128xf32>
      %158 = arith.subf %154, %157 : vector<8x128xf32>
      %159 = arith.mulf %158, %146 : vector<8x128xf32>
      %c4 = arith.constant 4 : index
      %160 = memref.load %arg11[%c4] : memref<8xf32, #tpu.memory_space<smem>>
      %161 = vector.extract_strided_slice %159 {offsets = [0, 0], sizes = [6, 128], strides = [1, 1]} : vector<8x128xf32> to vector<6x128xf32>
      %162 = vector.extract_strided_slice %159 {offsets = [2, 0], sizes = [6, 128], strides = [1, 1]} : vector<8x128xf32> to vector<6x128xf32>
      %163 = arith.subf %161, %162 : vector<6x128xf32>
      %164 = math.absf %163 : vector<6x128xf32>
      %165 = vector.extract_strided_slice %146 {offsets = [0, 0], sizes = [6, 128], strides = [1, 1]} : vector<8x128xf32> to vector<6x128xf32>
      %166 = vector.extract_strided_slice %146 {offsets = [2, 0], sizes = [6, 128], strides = [1, 1]} : vector<8x128xf32> to vector<6x128xf32>
      %167 = arith.mulf %165, %166 : vector<6x128xf32>
      %168 = arith.mulf %164, %167 : vector<6x128xf32>
      %169 = vector.shape_cast %168 : vector<6x128xf32> to vector<1x6x128xf32>
      %cst_53 = arith.constant dense<0.000000e+00> : vector<1xf32>
      %170 = vector.multi_reduction <add>, %169, %cst_53 [1, 2] : vector<1x6x128xf32> to vector<1xf32>
      %171 = vector.shape_cast %170 : vector<1xf32> to vector<1x1x1xf32>
      %172 = vector.extract %171[0, 0, 0] : f32 from vector<1x1x1xf32>
      %cst_54 = arith.constant 0.000000e+00 : f32
      %173 = arith.addf %cst_54, %172 : f32
      %174 = vector.extract_strided_slice %159 {offsets = [0, 0], sizes = [8, 126], strides = [1, 1]} : vector<8x128xf32> to vector<8x126xf32>
      %175 = vector.extract_strided_slice %159 {offsets = [0, 2], sizes = [8, 126], strides = [1, 1]} : vector<8x128xf32> to vector<8x126xf32>
      %176 = arith.subf %174, %175 : vector<8x126xf32>
      %177 = math.absf %176 : vector<8x126xf32>
      %178 = vector.extract_strided_slice %146 {offsets = [0, 0], sizes = [8, 126], strides = [1, 1]} : vector<8x128xf32> to vector<8x126xf32>
      %179 = vector.extract_strided_slice %146 {offsets = [0, 2], sizes = [8, 126], strides = [1, 1]} : vector<8x128xf32> to vector<8x126xf32>
      %180 = arith.mulf %178, %179 : vector<8x126xf32>
      %181 = arith.mulf %177, %180 : vector<8x126xf32>
      %182 = vector.shape_cast %181 : vector<8x126xf32> to vector<1x8x126xf32>
      %cst_55 = arith.constant dense<0.000000e+00> : vector<1xf32>
      %183 = vector.multi_reduction <add>, %182, %cst_55 [1, 2] : vector<1x8x126xf32> to vector<1xf32>
      %184 = vector.shape_cast %183 : vector<1xf32> to vector<1x1x1xf32>
      %185 = vector.extract %184[0, 0, 0] : f32 from vector<1x1x1xf32>
      %186 = arith.addf %173, %185 : f32
      %187 = arith.divf %186, %151 : f32
      %188 = arith.addf %160, %187 : f32
      %c4_56 = arith.constant 4 : index
      %189 = memref.load %arg11[%c4_56] : memref<8xf32, #tpu.memory_space<smem>>
      memref.store %188, %arg11[%c4_56] : memref<8xf32, #tpu.memory_space<smem>>
    } else {
    }
    %c0 = arith.constant 0 : index
    %c0_5 = arith.constant 0 : index
    %c0_6 = arith.constant 0 : index
    %9 = vector.load %arg2[%c0, %c0_5, %c0_6] : memref<1x16x16xf32, #tpu.memory_space<vmem>>, vector<1x16x16xf32>
    %10 = vector.shape_cast %9 : vector<1x16x16xf32> to vector<16x16xf32>
    %c0_7 = arith.constant 0 : index
    %c0_8 = arith.constant 0 : index
    %c0_9 = arith.constant 0 : index
    %11 = vector.load %arg3[%c0_7, %c0_8, %c0_9] : memref<1x16x16xf32, #tpu.memory_space<vmem>>, vector<1x16x16xf32>
    %12 = vector.shape_cast %11 : vector<1x16x16xf32> to vector<16x16xf32>
    %cst = arith.constant 0.000000e+00 : f32
    %13 = vector.broadcast %cst : f32 to vector<16x16xf32>
    %14 = arith.cmpf ogt, %12, %13 : vector<16x16xf32>
    %15 = arith.extui %14 : vector<16x16xi1> to vector<16x16xi32>
    %16 = arith.sitofp %15 : vector<16x16xi32> to vector<16x16xf32>
    %cst_10 = arith.constant 9.99999974E-6 : f32
    %17 = vector.broadcast %cst_10 : f32 to vector<16x16xf32>
    %18 = arith.maximumf %10, %17 : vector<16x16xf32>
    %19 = math.log %18 : vector<16x16xf32>
    %cst_11 = arith.constant 9.99999974E-6 : f32
    %20 = vector.broadcast %cst_11 : f32 to vector<16x16xf32>
    %21 = arith.maximumf %12, %20 : vector<16x16xf32>
    %22 = math.log %21 : vector<16x16xf32>
    %23 = arith.subf %19, %22 : vector<16x16xf32>
    %24 = arith.mulf %23, %16 : vector<16x16xf32>
    %cst_12 = arith.constant 1.000000e-03 : f32
    %25 = vector.broadcast %cst_12 : f32 to vector<16x16xf32>
    %26 = arith.addf %10, %25 : vector<16x16xf32>
    %27 = math.log %26 : vector<16x16xf32>
    %cst_13 = arith.constant 1.000000e-03 : f32
    %28 = vector.broadcast %cst_13 : f32 to vector<16x16xf32>
    %29 = arith.addf %12, %28 : vector<16x16xf32>
    %30 = math.log %29 : vector<16x16xf32>
    %31 = arith.subf %27, %30 : vector<16x16xf32>
    %32 = arith.mulf %31, %16 : vector<16x16xf32>
    %c0_14 = arith.constant 0 : index
    %c0_15 = arith.constant 0 : index
    %c0_16 = arith.constant 0 : index
    %33 = vector.load %arg4[%c0_14, %c0_15, %c0_16] : memref<1x8x128xf32, #tpu.memory_space<vmem>>, vector<1x8x128xf32>
    %34 = vector.shape_cast %33 : vector<1x8x128xf32> to vector<8x128xf32>
    %c0_17 = arith.constant 0 : index
    %c0_18 = arith.constant 0 : index
    %c0_19 = arith.constant 0 : index
    %35 = vector.load %arg5[%c0_17, %c0_18, %c0_19] : memref<1x8x128xf32, #tpu.memory_space<vmem>>, vector<1x8x128xf32>
    %36 = vector.shape_cast %35 : vector<1x8x128xf32> to vector<8x128xf32>
    %cst_20 = arith.constant 0.000000e+00 : f32
    %37 = vector.broadcast %cst_20 : f32 to vector<8x128xf32>
    %38 = arith.cmpf ogt, %36, %37 : vector<8x128xf32>
    %39 = arith.extui %38 : vector<8x128xi1> to vector<8x128xi32>
    %40 = arith.sitofp %39 : vector<8x128xi32> to vector<8x128xf32>
    %cst_21 = arith.constant 1.000000e-03 : f32
    %41 = vector.broadcast %cst_21 : f32 to vector<8x128xf32>
    %42 = arith.addf %34, %41 : vector<8x128xf32>
    %43 = math.log %42 : vector<8x128xf32>
    %cst_22 = arith.constant 1.000000e-03 : f32
    %44 = vector.broadcast %cst_22 : f32 to vector<8x128xf32>
    %45 = arith.addf %36, %44 : vector<8x128xf32>
    %46 = math.log %45 : vector<8x128xf32>
    %47 = arith.subf %43, %46 : vector<8x128xf32>
    %48 = arith.mulf %47, %40 : vector<8x128xf32>
    %c0_23 = arith.constant 0 : index
    %49 = memref.load %arg11[%c0_23] : memref<8xf32, #tpu.memory_space<smem>>
    %50 = vector.shape_cast %16 : vector<16x16xf32> to vector<1x16x16xf32>
    %cst_24 = arith.constant dense<0.000000e+00> : vector<1xf32>
    %51 = vector.multi_reduction <add>, %50, %cst_24 [1, 2] : vector<1x16x16xf32> to vector<1xf32>
    %52 = vector.shape_cast %51 : vector<1xf32> to vector<1x1x1xf32>
    %53 = vector.extract %52[0, 0, 0] : f32 from vector<1x1x1xf32>
    %54 = arith.addf %49, %53 : f32
    %c0_25 = arith.constant 0 : index
    %55 = memref.load %arg11[%c0_25] : memref<8xf32, #tpu.memory_space<smem>>
    memref.store %54, %arg11[%c0_25] : memref<8xf32, #tpu.memory_space<smem>>
    %c1 = arith.constant 1 : index
    %56 = memref.load %arg11[%c1] : memref<8xf32, #tpu.memory_space<smem>>
    %57 = arith.mulf %24, %24 : vector<16x16xf32>
    %58 = vector.shape_cast %57 : vector<16x16xf32> to vector<1x16x16xf32>
    %cst_26 = arith.constant dense<0.000000e+00> : vector<1xf32>
    %59 = vector.multi_reduction <add>, %58, %cst_26 [1, 2] : vector<1x16x16xf32> to vector<1xf32>
    %60 = vector.shape_cast %59 : vector<1xf32> to vector<1x1x1xf32>
    %61 = vector.extract %60[0, 0, 0] : f32 from vector<1x1x1xf32>
    %62 = arith.addf %56, %61 : f32
    %c1_27 = arith.constant 1 : index
    %63 = memref.load %arg11[%c1_27] : memref<8xf32, #tpu.memory_space<smem>>
    memref.store %62, %arg11[%c1_27] : memref<8xf32, #tpu.memory_space<smem>>
    %c2 = arith.constant 2 : index
    %64 = memref.load %arg11[%c2] : memref<8xf32, #tpu.memory_space<smem>>
    %65 = vector.shape_cast %24 : vector<16x16xf32> to vector<1x16x16xf32>
    %cst_28 = arith.constant dense<0.000000e+00> : vector<1xf32>
    %66 = vector.multi_reduction <add>, %65, %cst_28 [1, 2] : vector<1x16x16xf32> to vector<1xf32>
    %67 = vector.shape_cast %66 : vector<1xf32> to vector<1x1x1xf32>
    %68 = vector.extract %67[0, 0, 0] : f32 from vector<1x1x1xf32>
    %69 = arith.addf %64, %68 : f32
    %c2_29 = arith.constant 2 : index
    %70 = memref.load %arg11[%c2_29] : memref<8xf32, #tpu.memory_space<smem>>
    memref.store %69, %arg11[%c2_29] : memref<8xf32, #tpu.memory_space<smem>>
    %c3 = arith.constant 3 : index
    %71 = memref.load %arg11[%c3] : memref<8xf32, #tpu.memory_space<smem>>
    %72 = vector.extract_strided_slice %32 {offsets = [0, 0], sizes = [14, 16], strides = [1, 1]} : vector<16x16xf32> to vector<14x16xf32>
    %73 = vector.extract_strided_slice %32 {offsets = [2, 0], sizes = [14, 16], strides = [1, 1]} : vector<16x16xf32> to vector<14x16xf32>
    %74 = arith.subf %72, %73 : vector<14x16xf32>
    %75 = math.absf %74 : vector<14x16xf32>
    %76 = vector.extract_strided_slice %16 {offsets = [0, 0], sizes = [14, 16], strides = [1, 1]} : vector<16x16xf32> to vector<14x16xf32>
    %77 = vector.extract_strided_slice %16 {offsets = [2, 0], sizes = [14, 16], strides = [1, 1]} : vector<16x16xf32> to vector<14x16xf32>
    %78 = arith.mulf %76, %77 : vector<14x16xf32>
    %79 = arith.mulf %75, %78 : vector<14x16xf32>
    %80 = vector.shape_cast %79 : vector<14x16xf32> to vector<1x14x16xf32>
    %cst_30 = arith.constant dense<0.000000e+00> : vector<1xf32>
    %81 = vector.multi_reduction <add>, %80, %cst_30 [1, 2] : vector<1x14x16xf32> to vector<1xf32>
    %82 = vector.shape_cast %81 : vector<1xf32> to vector<1x1x1xf32>
    %83 = vector.extract %82[0, 0, 0] : f32 from vector<1x1x1xf32>
    %cst_31 = arith.constant 0.000000e+00 : f32
    %84 = arith.addf %cst_31, %83 : f32
    %85 = vector.extract_strided_slice %32 {offsets = [0, 0], sizes = [16, 14], strides = [1, 1]} : vector<16x16xf32> to vector<16x14xf32>
    %86 = vector.extract_strided_slice %32 {offsets = [0, 2], sizes = [16, 14], strides = [1, 1]} : vector<16x16xf32> to vector<16x14xf32>
    %87 = arith.subf %85, %86 : vector<16x14xf32>
    %88 = math.absf %87 : vector<16x14xf32>
    %89 = vector.extract_strided_slice %16 {offsets = [0, 0], sizes = [16, 14], strides = [1, 1]} : vector<16x16xf32> to vector<16x14xf32>
    %90 = vector.extract_strided_slice %16 {offsets = [0, 2], sizes = [16, 14], strides = [1, 1]} : vector<16x16xf32> to vector<16x14xf32>
    %91 = arith.mulf %89, %90 : vector<16x14xf32>
    %92 = arith.mulf %88, %91 : vector<16x14xf32>
    %93 = vector.shape_cast %92 : vector<16x14xf32> to vector<1x16x14xf32>
    %cst_32 = arith.constant dense<0.000000e+00> : vector<1xf32>
    %94 = vector.multi_reduction <add>, %93, %cst_32 [1, 2] : vector<1x16x14xf32> to vector<1xf32>
    %95 = vector.shape_cast %94 : vector<1xf32> to vector<1x1x1xf32>
    %96 = vector.extract %95[0, 0, 0] : f32 from vector<1x1x1xf32>
    %97 = arith.addf %84, %96 : f32
    %98 = arith.addf %71, %97 : f32
    %c3_33 = arith.constant 3 : index
    %99 = memref.load %arg11[%c3_33] : memref<8xf32, #tpu.memory_space<smem>>
    memref.store %98, %arg11[%c3_33] : memref<8xf32, #tpu.memory_space<smem>>
    %c5 = arith.constant 5 : index
    %100 = memref.load %arg11[%c5] : memref<8xf32, #tpu.memory_space<smem>>
    %101 = vector.shape_cast %40 : vector<8x128xf32> to vector<1x8x128xf32>
    %cst_34 = arith.constant dense<0.000000e+00> : vector<1xf32>
    %102 = vector.multi_reduction <add>, %101, %cst_34 [1, 2] : vector<1x8x128xf32> to vector<1xf32>
    %103 = vector.shape_cast %102 : vector<1xf32> to vector<1x1x1xf32>
    %104 = vector.extract %103[0, 0, 0] : f32 from vector<1x1x1xf32>
    %105 = arith.addf %100, %104 : f32
    %c5_35 = arith.constant 5 : index
    %106 = memref.load %arg11[%c5_35] : memref<8xf32, #tpu.memory_space<smem>>
    memref.store %105, %arg11[%c5_35] : memref<8xf32, #tpu.memory_space<smem>>
    %c6 = arith.constant 6 : index
    %107 = memref.load %arg11[%c6] : memref<8xf32, #tpu.memory_space<smem>>
    %108 = vector.extract_strided_slice %48 {offsets = [0, 0], sizes = [6, 128], strides = [1, 1]} : vector<8x128xf32> to vector<6x128xf32>
    %109 = vector.extract_strided_slice %48 {offsets = [2, 0], sizes = [6, 128], strides = [1, 1]} : vector<8x128xf32> to vector<6x128xf32>
    %110 = arith.subf %108, %109 : vector<6x128xf32>
    %111 = math.absf %110 : vector<6x128xf32>
    %112 = vector.extract_strided_slice %40 {offsets = [0, 0], sizes = [6, 128], strides = [1, 1]} : vector<8x128xf32> to vector<6x128xf32>
    %113 = vector.extract_strided_slice %40 {offsets = [2, 0], sizes = [6, 128], strides = [1, 1]} : vector<8x128xf32> to vector<6x128xf32>
    %114 = arith.mulf %112, %113 : vector<6x128xf32>
    %115 = arith.mulf %111, %114 : vector<6x128xf32>
    %116 = vector.shape_cast %115 : vector<6x128xf32> to vector<1x6x128xf32>
    %cst_36 = arith.constant dense<0.000000e+00> : vector<1xf32>
    %117 = vector.multi_reduction <add>, %116, %cst_36 [1, 2] : vector<1x6x128xf32> to vector<1xf32>
    %118 = vector.shape_cast %117 : vector<1xf32> to vector<1x1x1xf32>
    %119 = vector.extract %118[0, 0, 0] : f32 from vector<1x1x1xf32>
    %cst_37 = arith.constant 0.000000e+00 : f32
    %120 = arith.addf %cst_37, %119 : f32
    %121 = vector.extract_strided_slice %48 {offsets = [0, 0], sizes = [8, 126], strides = [1, 1]} : vector<8x128xf32> to vector<8x126xf32>
    %122 = vector.extract_strided_slice %48 {offsets = [0, 2], sizes = [8, 126], strides = [1, 1]} : vector<8x128xf32> to vector<8x126xf32>
    %123 = arith.subf %121, %122 : vector<8x126xf32>
    %124 = math.absf %123 : vector<8x126xf32>
    %125 = vector.extract_strided_slice %40 {offsets = [0, 0], sizes = [8, 126], strides = [1, 1]} : vector<8x128xf32> to vector<8x126xf32>
    %126 = vector.extract_strided_slice %40 {offsets = [0, 2], sizes = [8, 126], strides = [1, 1]} : vector<8x128xf32> to vector<8x126xf32>
    %127 = arith.mulf %125, %126 : vector<8x126xf32>
    %128 = arith.mulf %124, %127 : vector<8x126xf32>
    %129 = vector.shape_cast %128 : vector<8x126xf32> to vector<1x8x126xf32>
    %cst_38 = arith.constant dense<0.000000e+00> : vector<1xf32>
    %130 = vector.multi_reduction <add>, %129, %cst_38 [1, 2] : vector<1x8x126xf32> to vector<1xf32>
    %131 = vector.shape_cast %130 : vector<1xf32> to vector<1x1x1xf32>
    %132 = vector.extract %131[0, 0, 0] : f32 from vector<1x1x1xf32>
    %133 = arith.addf %120, %132 : f32
    %134 = arith.addf %107, %133 : f32
    %c6_39 = arith.constant 6 : index
    %135 = memref.load %arg11[%c6_39] : memref<8xf32, #tpu.memory_space<smem>>
    memref.store %134, %arg11[%c6_39] : memref<8xf32, #tpu.memory_space<smem>>
    %c0_i32_40 = arith.constant 0 : i32
    %136 = arith.cmpi eq, %arg1, %c0_i32_40 : i32
    %137 = arith.extui %136 : i1 to i32
    %c0_i32_41 = arith.constant 0 : i32
    %138 = arith.cmpi ne, %137, %c0_i32_41 : i32
    scf.if %138 {
      %c0_42 = arith.constant 0 : index
      %139 = memref.load %arg11[%c0_42] : memref<8xf32, #tpu.memory_space<smem>>
      %cst_43 = arith.constant 1.000000e+00 : f32
      %140 = arith.maximumf %139, %cst_43 : f32
      %c5_44 = arith.constant 5 : index
      %141 = memref.load %arg11[%c5_44] : memref<8xf32, #tpu.memory_space<smem>>
      %cst_45 = arith.constant 1.000000e+00 : f32
      %142 = arith.maximumf %141, %cst_45 : f32
      %c1_46 = arith.constant 1 : index
      %143 = memref.load %arg11[%c1_46] : memref<8xf32, #tpu.memory_space<smem>>
      %144 = arith.divf %143, %140 : f32
      %c2_47 = arith.constant 2 : index
      %145 = memref.load %arg11[%c2_47] : memref<8xf32, #tpu.memory_space<smem>>
      %c2_48 = arith.constant 2 : index
      %146 = memref.load %arg11[%c2_48] : memref<8xf32, #tpu.memory_space<smem>>
      %147 = arith.mulf %145, %146 : f32
      %148 = arith.mulf %140, %140 : f32
      %149 = arith.divf %147, %148 : f32
      %cst_49 = arith.constant 8.500000e-01 : f32
      %150 = arith.mulf %cst_49, %149 : f32
      %151 = arith.subf %144, %150 : f32
      %c3_50 = arith.constant 3 : index
      %152 = memref.load %arg11[%c3_50] : memref<8xf32, #tpu.memory_space<smem>>
      %153 = arith.divf %152, %140 : f32
      %c6_51 = arith.constant 6 : index
      %154 = memref.load %arg11[%c6_51] : memref<8xf32, #tpu.memory_space<smem>>
      %155 = arith.divf %154, %142 : f32
      %156 = arith.addf %153, %155 : f32
      %c4 = arith.constant 4 : index
      %157 = memref.load %arg11[%c4] : memref<8xf32, #tpu.memory_space<smem>>
      %158 = arith.addf %156, %157 : f32
      %159 = tpu.iota {dimensions = array<i32: 2>} : vector<1x1x128xi32>
      %c0_i32_52 = arith.constant 0 : i32
      %160 = vector.broadcast %c0_i32_52 : i32 to vector<1x1x128xi32>
      %161 = arith.cmpi eq, %159, %160 : vector<1x1x128xi32>
      %c1_i32 = arith.constant 1 : i32
      %162 = vector.broadcast %c1_i32 : i32 to vector<1x1x128xi32>
      %163 = arith.cmpi eq, %159, %162 : vector<1x1x128xi32>
      %cst_53 = arith.constant 0.000000e+00 : f32
      %164 = vector.broadcast %158 : f32 to vector<1x1x128xf32>
      %165 = vector.broadcast %cst_53 : f32 to vector<1x1x128xf32>
      %166 = arith.select %163, %164, %165 : vector<1x1x128xi1>, vector<1x1x128xf32>
      %167 = vector.broadcast %151 : f32 to vector<1x1x128xf32>
      %168 = arith.select %161, %167, %166 : vector<1x1x128xi1>, vector<1x1x128xf32>
      %c0_54 = arith.constant 0 : index
      %c0_55 = arith.constant 0 : index
      %c0_56 = arith.constant 0 : index
      %169 = vector.load %arg10[%c0_54, %c0_55, %c0_56] : memref<1x1x128xf32, #tpu.memory_space<vmem>>, vector<1x1x128xf32>
      tpu.vector_store %arg10[%c0_54, %c0_55, %c0_56], %168 {strides = array<i32>} : memref<1x1x128xf32, #tpu.memory_space<vmem>>, vector<1x1x128xf32>,
    } else {
    }
    return
  }
  func.func @transform_0(%arg0: i32, %arg1: i32) -> (i32, i32, i32) {
    %c0_i32 = arith.constant 0 : i32
    %c0_i32_0 = arith.constant 0 : i32
    return %arg0, %arg1, %c0_i32 : i32, i32, i32
  }
  func.func @transform_1(%arg0: i32, %arg1: i32) -> (i32, i32, i32) {
    %c0_i32 = arith.constant 0 : i32
    %c0_i32_0 = arith.constant 0 : i32
    return %arg0, %arg1, %c0_i32 : i32, i32, i32
  }
  func.func @transform_2(%arg0: i32, %arg1: i32) -> (i32, i32, i32) {
    %c0_i32 = arith.constant 0 : i32
    %c0_i32_0 = arith.constant 0 : i32
    return %arg0, %arg1, %c0_i32 : i32, i32, i32
  }
  func.func @transform_3(%arg0: i32, %arg1: i32) -> (i32, i32, i32) {
    %c0_i32 = arith.constant 0 : i32
    %c0_i32_0 = arith.constant 0 : i32
    return %arg0, %arg1, %c0_i32 : i32, i32, i32
  }
  func.func @transform_4(%arg0: i32, %arg1: i32) -> (i32, i32, i32) {
    %c0_i32 = arith.constant 0 : i32
    %c0_i32_0 = arith.constant 0 : i32
    %c0_i32_1 = arith.constant 0 : i32
    return %arg0, %c0_i32, %c0_i32_0 : i32, i32, i32
  }
  func.func @transform_5(%arg0: i32, %arg1: i32) -> (i32, i32, i32) {
    %c0_i32 = arith.constant 0 : i32
    %c0_i32_0 = arith.constant 0 : i32
    %c0_i32_1 = arith.constant 0 : i32
    return %arg0, %c0_i32, %c0_i32_0 : i32, i32, i32
  }
  func.func @transform_6(%arg0: i32, %arg1: i32) -> (i32, i32, i32) {
    %c0_i32 = arith.constant 0 : i32
    %c0_i32_0 = arith.constant 0 : i32
    %c0_i32_1 = arith.constant 0 : i32
    return %arg0, %c0_i32, %c0_i32_0 : i32, i32, i32
  }
  func.func @transform_7(%arg0: i32, %arg1: i32) -> (i32, i32, i32) {
    %c0_i32 = arith.constant 0 : i32
    %c0_i32_0 = arith.constant 0 : i32
    %c0_i32_1 = arith.constant 0 : i32
    return %arg0, %c0_i32, %c0_i32_0 : i32, i32, i32
  }
  func.func @transform_8(%arg0: i32, %arg1: i32) -> (i32, i32, i32) {
    %c0_i32 = arith.constant 0 : i32
    %c0_i32_0 = arith.constant 0 : i32
    %c0_i32_1 = arith.constant 0 : i32
    return %arg0, %c0_i32, %c0_i32_0 : i32, i32, i32
  }
}

</mosaic_0001>

<llo_original>
// kernel: depth_loss_v3.1
$region0: #{depth_loss_v3.1}
  #allocation0 [shape = 'u32[]', space=smem, size = 0x4, offset = 0x4, fixed_abs, tag = 'smem constant byte address 0x4 - core index']
  #allocation1 [shape = 'u32[144,128]{1,0:T(1,128)}', space=vmem, size = 0x12000, scoped, tag = 'internal scratch']
  #allocation2 [shape = 'f32[8]{0:T(128)}', space=smem, size = 0x200, scoped, tag = 'scratch operand']
  #allocation3 [shape = 'f32[2,16]{1,0:T(2,128)}', space=vmem, size = 0x400, scoped, tag = 'scratch operand']
  #allocation4 [shape = 'f32[2,16]{1,0:T(2,128)}', space=vmem, size = 0x400, scoped, tag = 'scratch operand']
  #allocation5 [shape = 'f32[2,128]{1,0:T(2,128)}', space=vmem, size = 0x400, scoped, tag = 'scratch operand']
  #allocation6 [shape = 'f32[2,128]{1,0:T(2,128)}', space=vmem, size = 0x400, scoped, tag = 'scratch operand']
  %s0 = inlined_call_operand.vmem [shape: f32[2,16,16], index: 0, kind: input, shape index: {}]
  %s1 = inlined_call_operand.vmem [shape: f32[2,16,16], index: 1, kind: input, shape index: {}]
  %s2 = inlined_call_operand.vmem [shape: f32[2,8,128], index: 2, kind: input, shape index: {}]
  %s3 = inlined_call_operand.vmem [shape: f32[2,8,128], index: 3, kind: input, shape index: {}]
  %s4 = inlined_call_operand.vmem [shape: f32[2,8,128], index: 4, kind: input, shape index: {}]
  %s5 = inlined_call_operand.vmem [shape: f32[2,8,128], index: 5, kind: input, shape index: {}]
  %s6 = inlined_call_operand.vmem [shape: f32[2,8,128], index: 6, kind: input, shape index: {}]
  %s7 = inlined_call_operand.vmem [shape: f32[2,8,128], index: 7, kind: input, shape index: {}]
  %s8 = inlined_call_operand.vmem [shape: f32[2,1,128], index: 8, kind: output, shape index: {}]
  %s9 = sld [smem:[#allocation0]]
  $region73: #{depth_loss_v3.1} parent=0
    _
  %s11 = ssub.s32 1, %s9
  %s12 = scalar_select 0, %s11, %s9
  loop: start=0, step=1, limit=4
  $region2: #{depth_loss_v3.1} parent=0 // loop_pre_header
    _
  $region3: #{depth_loss_v3.1} parent=0 // loop_header
    %s14 = sphi 0, %s18
    %p15 = scmp.ge.s32.totalorder %s14, 4
    %s21 = sphi 0, %s33
    %s22 = sphi 0, %s29
    %s23 = sphi 0, %s21
    %s24 = sphi 0, %s22
    %s25 = sphi 0, %s23
    %s26 = sphi 0, %s24
    %s38 = sphi 0, %s40
    %s41 = sphi 0, %s38
    %s42 = sphi 0, %s41
    %s58 = sphi 0, %s42
    %s66 = sphi 0, %s68
    %s69 = sphi 0, %s66
    %s70 = sphi 0, %s69
    %s86 = sphi 0, %s70
    %s94 = sphi 0, %s96
    %s97 = sphi 0, %s94
    %s98 = sphi 0, %s97
    %s114 = sphi 0, %s98
    %s122 = sphi 0, %s124
    %s125 = sphi 0, %s122
    %s126 = sphi 0, %s125
    %s142 = sphi 0, %s126
    %s148 = sphi 0, %s150
    %s151 = sphi 0, %s148
    %s152 = sphi 0, %s151
    %s168 = sphi 0, %s152
    %s174 = sphi 0, %s176
    %s177 = sphi 0, %s174
    %s178 = sphi 0, %s177
    %s194 = sphi 0, %s178
    %s200 = sphi 0, %s202
    %s203 = sphi 0, %s200
    %s204 = sphi 0, %s203
    %s220 = sphi 0, %s204
    %s226 = sphi 0, %s228
    %s229 = sphi 0, %s226
    %s230 = sphi 0, %s229
    %s246 = sphi 0, %s230
    %s252 = sphi 0, %s254
    %s255 = sphi 0, %s252
    %s256 = sphi 0, %s255
    %s272 = sphi 0, %s256
  $region4: #{depth_loss_v3.1} parent=0 // loop_header_branch
    %17 = sbr.rel (%p15) target = $region8
  $region5: #{depth_loss_v3.1} parent=0 // loop_body
    %s19 = ssub.s32 %s14, 1
    %s20 = ssub.s32 %s14, 2
    %s27 = sadd.s32 1, %s22
    %p28 = scmp.ge.s32.totalorder %s27, 1
    %s29 = scalar_select %p28, 0, %s27
    %s30 = sadd.s32 1, %s21
    %s31 = scalar_select %p28, %s30, %s21
    %p32 = scmp.ge.s32.totalorder %s31, 2
    %s33 = scalar_select %p32, 0, %s31
    %s34 = ssub.s32 %s21, %s33
    %s35 = ssub.s32 %s22, %s29
    %s36 = sor.u32 %s34, %s35
    %p37 = scmp.eq.s32.totalorder %s36, 0
    %s39 = sadd.s32 %s38, 1
    %s40 = scalar_select %p37, %s38, %s39
    %p43 = pneg %p37
    %p44 = scmp.eq.s32.totalorder %s14, 1
    %p45 = por %p43, %p44
    %p46 = scmp.ne.s32.totalorder %s38, %s41
    %p47 = scmp.eq.s32.totalorder %s14, 0
    %p48 = por %p46, %p47
    %p49 = scmp.ne.s32.totalorder %s38, %s41
    %p50 = scmp.eq.s32.totalorder %s19, 1
    %p51 = por %p49, %p50
    %p52 = scmp.ne.s32.totalorder %s41, %s42
    %p53 = scmp.eq.s32.totalorder %s19, 0
    %p54 = por %p52, %p53
    %p55 = scmp.ne.s32.totalorder %s41, %s42
    %p56 = scmp.eq.s32.totalorder %s20, 1
    %p57 = por %p55, %p56
    %p59 = scmp.ne.s32.totalorder %s42, %s58
    %p60 = scmp.eq.s32.totalorder %s20, 0
    %p61 = por %p59, %p60
    %s62 = ssub.s32 %s21, %s33
    %s63 = ssub.s32 %s22, %s29
    %s64 = sor.u32 %s62, %s63
    %p65 = scmp.eq.s32.totalorder %s64, 0
    %s67 = sadd.s32 %s66, 1
    %s68 = scalar_select %p65, %s66, %s67
    %p71 = pneg %p65
    %p72 = scmp.eq.s32.totalorder %s14, 1
    %p73 = por %p71, %p72
    %p74 = scmp.ne.s32.totalorder %s66, %s69
    %p75 = scmp.eq.s32.totalorder %s14, 0
    %p76 = por %p74, %p75
    %p77 = scmp.ne.s32.totalorder %s66, %s69
    %p78 = scmp.eq.s32.totalorder %s19, 1
    %p79 = por %p77, %p78
    %p80 = scmp.ne.s32.totalorder %s69, %s70
    %p81 = scmp.eq.s32.totalorder %s19, 0
    %p82 = por %p80, %p81
    %p83 = scmp.ne.s32.totalorder %s69, %s70
    %p84 = scmp.eq.s32.totalorder %s20, 1
    %p85 = por %p83, %p84
    %p87 = scmp.ne.s32.totalorder %s70, %s86
    %p88 = scmp.eq.s32.totalorder %s20, 0
    %p89 = por %p87, %p88
    %s90 = ssub.s32 %s21, %s33
    %s91 = ssub.s32 %s22, %s29
    %s92 = sor.u32 %s90, %s91
    %p93 = scmp.eq.s32.totalorder %s92, 0
    %s95 = sadd.s32 %s94, 1
    %s96 = scalar_select %p93, %s94, %s95
    %p99 = pneg %p93
    %p100 = scmp.eq.s32.totalorder %s14, 1
    %p101 = por %p99, %p100
    %p102 = scmp.ne.s32.totalorder %s94, %s97
    %p103 = scmp.eq.s32.totalorder %s14, 0
    %p104 = por %p102, %p103
    %p105 = scmp.ne.s32.totalorder %s94, %s97
    %p106 = scmp.eq.s32.totalorder %s19, 1
    %p107 = por %p105, %p106
    %p108 = scmp.ne.s32.totalorder %s97, %s98
    %p109 = scmp.eq.s32.totalorder %s19, 0
    %p110 = por %p108, %p109
    %p111 = scmp.ne.s32.totalorder %s97, %s98
    %p112 = scmp.eq.s32.totalorder %s20, 1
    %p113 = por %p111, %p112
    %p115 = scmp.ne.s32.totalorder %s98, %s114
    %p116 = scmp.eq.s32.totalorder %s20, 0
    %p117 = por %p115, %p116
    %s118 = ssub.s32 %s21, %s33
    %s119 = ssub.s32 %s22, %s29
    %s120 = sor.u32 %s118, %s119
    %p121 = scmp.eq.s32.totalorder %s120, 0
    %s123 = sadd.s32 %s122, 1
    %s124 = scalar_select %p121, %s122, %s123
    %p127 = pneg %p121
    %p128 = scmp.eq.s32.totalorder %s14, 1
    %p129 = por %p127, %p128
    %p130 = scmp.ne.s32.totalorder %s122, %s125
    %p131 = scmp.eq.s32.totalorder %s14, 0
    %p132 = por %p130, %p131
    %p133 = scmp.ne.s32.totalorder %s122, %s125
    %p134 = scmp.eq.s32.totalorder %s19, 1
    %p135 = por %p133, %p134
    %p136 = scmp.ne.s32.totalorder %s125, %s126
    %p137 = scmp.eq.s32.totalorder %s19, 0
    %p138 = por %p136, %p137
    %p139 = scmp.ne.s32.totalorder %s125, %s126
    %p140 = scmp.eq.s32.totalorder %s20, 1
    %p141 = por %p139, %p140
    %p143 = scmp.ne.s32.totalorder %s126, %s142
    %p144 = scmp.eq.s32.totalorder %s20, 0
    %p145 = por %p143, %p144
    %s146 = ssub.s32 %s21, %s33
    %p147 = scmp.eq.s32.totalorder %s146, 0
    %s149 = sadd.s32 %s148, 1
    %s150 = scalar_select %p147, %s148, %s149
    %p153 = pneg %p147
    %p154 = scmp.eq.s32.totalorder %s14, 1
    %p155 = por %p153, %p154
    %p156 = scmp.ne.s32.totalorder %s148, %s151
    %p157 = scmp.eq.s32.totalorder %s14, 0
    %p158 = por %p156, %p157
    %p159 = scmp.ne.s32.totalorder %s148, %s151
    %p160 = scmp.eq.s32.totalorder %s19, 1
    %p161 = por %p159, %p160
    %p162 = scmp.ne.s32.totalorder %s151, %s152
    %p163 = scmp.eq.s32.totalorder %s19, 0
    %p164 = por %p162, %p163
    %p165 = scmp.ne.s32.totalorder %s151, %s152
    %p166 = scmp.eq.s32.totalorder %s20, 1
    %p167 = por %p165, %p166
    %p169 = scmp.ne.s32.totalorder %s152, %s168
    %p170 = scmp.eq.s32.totalorder %s20, 0
    %p171 = por %p169, %p170
    %s172 = ssub.s32 %s21, %s33
    %p173 = scmp.eq.s32.totalorder %s172, 0
    %s175 = sadd.s32 %s174, 1
    %s176 = scalar_select %p173, %s174, %s175
    %p179 = pneg %p173
    %p180 = scmp.eq.s32.totalorder %s14, 1
    %p181 = por %p179, %p180
    %p182 = scmp.ne.s32.totalorder %s174, %s177
    %p183 = scmp.eq.s32.totalorder %s14, 0
    %p184 = por %p182, %p183
    %p185 = scmp.ne.s32.totalorder %s174, %s177
    %p186 = scmp.eq.s32.totalorder %s19, 1
    %p187 = por %p185, %p186
    %p188 = scmp.ne.s32.totalorder %s177, %s178
    %p189 = scmp.eq.s32.totalorder %s19, 0
    %p190 = por %p188, %p189
    %p191 = scmp.ne.s32.totalorder %s177, %s178
    %p192 = scmp.eq.s32.totalorder %s20, 1
    %p193 = por %p191, %p192
    %p195 = scmp.ne.s32.totalorder %s178, %s194
    %p196 = scmp.eq.s32.totalorder %s20, 0
    %p197 = por %p195, %p196
    %s198 = ssub.s32 %s21, %s33
    %p199 = scmp.eq.s32.totalorder %s198, 0
    %s201 = sadd.s32 %s200, 1
    %s202 = scalar_select %p199, %s200, %s201
    %p205 = pneg %p199
    %p206 = scmp.eq.s32.totalorder %s14, 1
    %p207 = por %p205, %p206
    %p208 = scmp.ne.s32.totalorder %s200, %s203
    %p209 = scmp.eq.s32.totalorder %s14, 0
    %p210 = por %p208, %p209
    %p211 = scmp.ne.s32.totalorder %s200, %s203
    %p212 = scmp.eq.s32.totalorder %s19, 1
    %p213 = por %p211, %p212
    %p214 = scmp.ne.s32.totalorder %s203, %s204
    %p215 = scmp.eq.s32.totalorder %s19, 0
    %p216 = por %p214, %p215
    %p217 = scmp.ne.s32.totalorder %s203, %s204
    %p218 = scmp.eq.s32.totalorder %s20, 1
    %p219 = por %p217, %p218
    %p221 = scmp.ne.s32.totalorder %s204, %s220
    %p222 = scmp.eq.s32.totalorder %s20, 0
    %p223 = por %p221, %p222
    %s224 = ssub.s32 %s21, %s33
    %p225 = scmp.eq.s32.totalorder %s224, 0
    %s227 = sadd.s32 %s226, 1
    %s228 = scalar_select %p225, %s226, %s227
    %p231 = pneg %p225
    %p232 = scmp.eq.s32.totalorder %s14, 1
    %p233 = por %p231, %p232
    %p234 = scmp.ne.s32.totalorder %s226, %s229
    %p235 = scmp.eq.s32.totalorder %s14, 0
    %p236 = por %p234, %p235
    %p237 = scmp.ne.s32.totalorder %s226, %s229
    %p238 = scmp.eq.s32.totalorder %s19, 1
    %p239 = por %p237, %p238
    %p240 = scmp.ne.s32.totalorder %s229, %s230
    %p241 = scmp.eq.s32.totalorder %s19, 0
    %p242 = por %p240, %p241
    %p243 = scmp.ne.s32.totalorder %s229, %s230
    %p244 = scmp.eq.s32.totalorder %s20, 1
    %p245 = por %p243, %p244
    %p247 = scmp.ne.s32.totalorder %s230, %s246
    %p248 = scmp.eq.s32.totalorder %s20, 0
    %p249 = por %p247, %p248
    %s250 = ssub.s32 %s21, %s33
    %p251 = scmp.eq.s32.totalorder %s250, 0
    %s253 = sadd.s32 %s252, 1
    %s254 = scalar_select %p251, %s252, %s253
    %p257 = pneg %p251
    %p258 = scmp.eq.s32.totalorder %s14, 1
    %p259 = por %p257, %p258
    %p260 = scmp.ne.s32.totalorder %s252, %s255
    %p261 = scmp.eq.s32.totalorder %s14, 0
    %p262 = por %p260, %p261
    %p263 = scmp.ne.s32.totalorder %s252, %s255
    %p264 = scmp.eq.s32.totalorder %s19, 1
    %p265 = por %p263, %p264
    %p266 = scmp.ne.s32.totalorder %s255, %s256
    %p267 = scmp.eq.s32.totalorder %s19, 0
    %p268 = por %p266, %p267
    %p269 = scmp.ne.s32.totalorder %s255, %s256
    %p270 = scmp.eq.s32.totalorder %s20, 1
    %p271 = por %p269, %p270
    %p273 = scmp.ne.s32.totalorder %s256, %s272
    %p274 = scmp.eq.s32.totalorder %s20, 0
    %p275 = por %p273, %p274
    %p276 = scmp.le.s32.totalorder 1, %s14
    %p277 = scmp.lt.s32.totalorder %s14, 3
    %p278 = pnand %p276, %p277
    %p279 = pneg %p278
    // Predicated region
    $region9: #{depth_loss_v3.1} parent=5 // pred_check
      _
    $region10: #{depth_loss_v3.1} parent=5 // pred_check_branch
      %281 = sbr.rel (%p278) target = $region12
    $region11: #{depth_loss_v3.1} parent=5 // pred_region
      %s282 = ssub.s32 %s14, 1
    $region12: #{depth_loss_v3.1} parent=5 // pred_fallthru
      _
    %p283 = scmp.lt.s32.totalorder %s14, 2
    // Predicated region
    $region13: #{depth_loss_v3.1} parent=5 // pred_check
      %p284 = pneg %p283
    $region14: #{depth_loss_v3.1} parent=5 // pred_check_branch
      %286 = sbr.rel (%p284) target = $region16
    $region15: #{depth_loss_v3.1} parent=5 // pred_region
      // Predicated region
      $region17: #{depth_loss_v3.1} parent=15 // pred_check
        %p287 = pneg %p48
      $region18: #{depth_loss_v3.1} parent=15 // pred_check_branch
        %289 = sbr.rel (%p287) target = $region20
      $region19: #{depth_loss_v3.1} parent=15 // pred_region
        %s290 = smul.u32 2, %s22
        %p291 = scmp.lt.s32.totalorder %s21, 1
        %s292 = scalar_select %p291, %s21, 1
        %p293 = scmp.lt.s32.totalorder %s290, 1
        %s294 = scalar_select %p293, %s290, 1
        %s295 = smul.addr %s292, 2
        %s296 = sadd.s32 %s294, %s295
        %s297 = smul.addr %s296, 8
        %s298 = scalar_lea.vmem %s0, %s297
        %s299 = smul.u32 2, %s22
      $region20: #{depth_loss_v3.1} parent=15 // pred_fallthru
        _
      // Predicated region
      $region21: #{depth_loss_v3.1} parent=15 // pred_check
        %p300 = pneg %p76
      $region22: #{depth_loss_v3.1} parent=15 // pred_check_branch
        %302 = sbr.rel (%p300) target = $region24
      $region23: #{depth_loss_v3.1} parent=15 // pred_region
        %s303 = smul.u32 2, %s22
        %p304 = scmp.lt.s32.totalorder %s21, 1
        %s305 = scalar_select %p304, %s21, 1
        %p306 = scmp.lt.s32.totalorder %s303, 1
        %s307 = scalar_select %p306, %s303, 1
        %s308 = smul.addr %s305, 2
        %s309 = sadd.s32 %s307, %s308
        %s310 = smul.addr %s309, 8
        %s311 = scalar_lea.vmem %s1, %s310
        %s312 = smul.u32 2, %s22
      $region24: #{depth_loss_v3.1} parent=15 // pred_fallthru
        _
      // Predicated region
      $region25: #{depth_loss_v3.1} parent=15 // pred_check
        %p313 = pneg %p104
      $region26: #{depth_loss_v3.1} parent=15 // pred_check_branch
        %315 = sbr.rel (%p313) target = $region28
      $region27: #{depth_loss_v3.1} parent=15 // pred_region
        %p316 = scmp.lt.s32.totalorder %s21, 1
        %s317 = scalar_select %p316, %s21, 1
        %p318 = scmp.lt.s32.totalorder %s22, 0
        %s319 = scalar_select %p318, %s22, 0
        %s320 = sadd.s32 %s319, %s317
        %s321 = smul.addr %s320, 8
        %s322 = scalar_lea.vmem %s2, %s321
      $region28: #{depth_loss_v3.1} parent=15 // pred_fallthru
        _
      // Predicated region
      $region29: #{depth_loss_v3.1} parent=15 // pred_check
        %p323 = pneg %p132
      $region30: #{depth_loss_v3.1} parent=15 // pred_check_branch
        %325 = sbr.rel (%p323) target = $region32
      $region31: #{depth_loss_v3.1} parent=15 // pred_region
        %p326 = scmp.lt.s32.totalorder %s21, 1
        %s327 = scalar_select %p326, %s21, 1
        %p328 = scmp.lt.s32.totalorder %s22, 0
        %s329 = scalar_select %p328, %s22, 0
        %s330 = sadd.s32 %s329, %s327
        %s331 = smul.addr %s330, 8
        %s332 = scalar_lea.vmem %s3, %s331
      $region32: #{depth_loss_v3.1} parent=15 // pred_fallthru
        _
      // Predicated region
      $region33: #{depth_loss_v3.1} parent=15 // pred_check
        %p333 = pneg %p158
      $region34: #{depth_loss_v3.1} parent=15 // pred_check_branch
        %335 = sbr.rel (%p333) target = $region36
      $region35: #{depth_loss_v3.1} parent=15 // pred_region
        %p336 = scmp.lt.s32.totalorder %s21, 1
        %s337 = scalar_select %p336, %s21, 1
        %s338 = smul.addr %s337, 8
        %s339 = scalar_lea.vmem %s4, %s338
      $region36: #{depth_loss_v3.1} parent=15 // pred_fallthru
        _
      // Predicated region
      $region37: #{depth_loss_v3.1} parent=15 // pred_check
        %p340 = pneg %p184
      $region38: #{depth_loss_v3.1} parent=15 // pred_check_branch
        %342 = sbr.rel (%p340) target = $region40
      $region39: #{depth_loss_v3.1} parent=15 // pred_region
        %p343 = scmp.lt.s32.totalorder %s21, 1
        %s344 = scalar_select %p343, %s21, 1
        %s345 = smul.addr %s344, 8
        %s346 = scalar_lea.vmem %s5, %s345
      $region40: #{depth_loss_v3.1} parent=15 // pred_fallthru
        _
      // Predicated region
      $region41: #{depth_loss_v3.1} parent=15 // pred_check
        %p347 = pneg %p210
      $region42: #{depth_loss_v3.1} parent=15 // pred_check_branch
        %349 = sbr.rel (%p347) target = $region44
      $region43: #{depth_loss_v3.1} parent=15 // pred_region
        %p350 = scmp.lt.s32.totalorder %s21, 1
        %s351 = scalar_select %p350, %s21, 1
        %s352 = smul.addr %s351, 8
        %s353 = scalar_lea.vmem %s6, %s352
      $region44: #{depth_loss_v3.1} parent=15 // pred_fallthru
        _
      // Predicated region
      $region45: #{depth_loss_v3.1} parent=15 // pred_check
        %p354 = pneg %p236
      $region46: #{depth_loss_v3.1} parent=15 // pred_check_branch
        %356 = sbr.rel (%p354) target = $region48
      $region47: #{depth_loss_v3.1} parent=15 // pred_region
        %p357 = scmp.lt.s32.totalorder %s21, 1
        %s358 = scalar_select %p357, %s21, 1
        %s359 = smul.addr %s358, 8
        %s360 = scalar_lea.vmem %s7, %s359
      $region48: #{depth_loss_v3.1} parent=15 // pred_fallthru
        _
    $region16: #{depth_loss_v3.1} parent=5 // pred_fallthru
      _
    %p361 = scmp.le.s32.totalorder 1, %s14
    %p362 = scmp.lt.s32.totalorder %s14, 3
    %p363 = pnand %p361, %p362
    %p364 = pneg %p363
    // Predicated region
    $region49: #{depth_loss_v3.1} parent=5 // pred_check
      _
    $region50: #{depth_loss_v3.1} parent=5 // pred_check_branch
      %366 = sbr.rel (%p363) target = $region52
    $region51: #{depth_loss_v3.1} parent=5 // pred_region
      %s367 = ssub.s32 %s14, 1
      %s368 = smul.u32 2, %s24
      %p369 = scmp.lt.s32.totalorder %s23, 1
      %s370 = scalar_select %p369, %s23, 1
      %p371 = scmp.lt.s32.totalorder %s368, 1
      %s372 = scalar_select %p371, %s368, 1
      %s373 = smul.addr %s370, 2
      %s374 = sadd.s32 %s372, %s373
      %s375 = smul.addr %s374, 8
      %s376 = scalar_lea.vmem %s0, %s375
      %p377 = pneg %p54
      %p378 = pneg %p51
      %s379 = smul.u32 2, %s24
      %p380 = scmp.lt.s32.totalorder %s23, 1
      %s381 = scalar_select %p380, %s23, 1
      %p382 = scmp.lt.s32.totalorder %s379, 1
      %s383 = scalar_select %p382, %s379, 1
      %s384 = smul.addr %s381, 2
      %s385 = sadd.s32 %s383, %s384
      %s386 = smul.addr %s385, 8
      %s387 = scalar_lea.vmem %s1, %s386
      %p388 = pneg %p82
      %p389 = pneg %p79
      %p390 = scmp.lt.s32.totalorder %s23, 1
      %s391 = scalar_select %p390, %s23, 1
      %p392 = scmp.lt.s32.totalorder %s24, 0
      %s393 = scalar_select %p392, %s24, 0
      %s394 = sadd.s32 %s393, %s391
      %s395 = smul.addr %s394, 8
      %s396 = scalar_lea.vmem %s2, %s395
      %p397 = pneg %p110
      %p398 = pneg %p107
      %p399 = scmp.lt.s32.totalorder %s23, 1
      %s400 = scalar_select %p399, %s23, 1
      %p401 = scmp.lt.s32.totalorder %s24, 0
      %s402 = scalar_select %p401, %s24, 0
      %s403 = sadd.s32 %s402, %s400
      %s404 = smul.addr %s403, 8
      %s405 = scalar_lea.vmem %s3, %s404
      %p406 = pneg %p138
      %p407 = pneg %p135
      %p408 = scmp.lt.s32.totalorder %s23, 1
      %s409 = scalar_select %p408, %s23, 1
      %s410 = smul.addr %s409, 8
      %s411 = scalar_lea.vmem %s4, %s410
      %p412 = pneg %p164
      %p413 = pneg %p161
      %p414 = scmp.lt.s32.totalorder %s23, 1
      %s415 = scalar_select %p414, %s23, 1
      %s416 = smul.addr %s415, 8
      %s417 = scalar_lea.vmem %s5, %s416
      %p418 = pneg %p190
      %p419 = pneg %p187
      %p420 = scmp.lt.s32.totalorder %s23, 1
      %s421 = scalar_select %p420, %s23, 1
      %s422 = smul.addr %s421, 8
      %s423 = scalar_lea.vmem %s6, %s422
      %p424 = pneg %p216
      %p425 = pneg %p213
      %p426 = scmp.lt.s32.totalorder %s23, 1
      %s427 = scalar_select %p426, %s23, 1
      %s428 = smul.addr %s427, 8
      %s429 = scalar_lea.vmem %s7, %s428
      %p430 = pneg %p242
      %p431 = pneg %p239
      %p432 = pneg %p268
      %p433 = pneg %p265
      %p434 = scmp.lt.s32.totalorder %s23, 1
      %s435 = scalar_select %p434, %s23, 1
      %s436 = scalar_lea.vmem %s8, %s435
      %s437 = smul.u32 2, %s24
      %p438 = scmp.lt.s32.totalorder %s23, 1
      %s439 = scalar_select %p438, %s23, 1
      %p440 = scmp.lt.s32.totalorder %s437, 1
      %s441 = scalar_select %p440, %s437, 1
      %s442 = smul.addr %s439, 2
      %s443 = sadd.s32 %s441, %s442
      %s444 = smul.addr %s443, 8
      %s445 = scalar_lea.vmem %s0, %s444
      %s446 = smul.u32 2, %s24
      %s447 = smul.u32 2, %s24
      %p448 = scmp.lt.s32.totalorder %s23, 1
      %s449 = scalar_select %p448, %s23, 1
      %p450 = scmp.lt.s32.totalorder %s447, 1
      %s451 = scalar_select %p450, %s447, 1
      %s452 = smul.addr %s449, 2
      %s453 = sadd.s32 %s451, %s452
      %s454 = smul.addr %s453, 8
      %s455 = scalar_lea.vmem %s1, %s454
      %s456 = smul.u32 2, %s24
      %p457 = scmp.lt.s32.totalorder %s23, 1
      %s458 = scalar_select %p457, %s23, 1
      %p459 = scmp.lt.s32.totalorder %s24, 0
      %s460 = scalar_select %p459, %s24, 0
      %s461 = sadd.s32 %s460, %s458
      %s462 = smul.addr %s461, 8
      %s463 = scalar_lea.vmem %s2, %s462
      %p464 = scmp.lt.s32.totalorder %s23, 1
      %s465 = scalar_select %p464, %s23, 1
      %p466 = scmp.lt.s32.totalorder %s24, 0
      %s467 = scalar_select %p466, %s24, 0
      %s468 = sadd.s32 %s467, %s465
      %s469 = smul.addr %s468, 8
      %s470 = scalar_lea.vmem %s3, %s469
      %p471 = scmp.lt.s32.totalorder %s23, 1
      %s472 = scalar_select %p471, %s23, 1
      %s473 = smul.addr %s472, 8
      %s474 = scalar_lea.vmem %s4, %s473
      %p475 = scmp.lt.s32.totalorder %s23, 1
      %s476 = scalar_select %p475, %s23, 1
      %s477 = smul.addr %s476, 8
      %s478 = scalar_lea.vmem %s5, %s477
      %p479 = scmp.lt.s32.totalorder %s23, 1
      %s480 = scalar_select %p479, %s23, 1
      %s481 = smul.addr %s480, 8
      %s482 = scalar_lea.vmem %s6, %s481
      %p483 = scmp.lt.s32.totalorder %s23, 1
      %s484 = scalar_select %p483, %s23, 1
      %s485 = smul.addr %s484, 8
      %s486 = scalar_lea.vmem %s7, %s485
      %p487 = scmp.lt.s32.totalorder %s23, 1
      %s488 = scalar_select %p487, %s23, 1
      %s489 = scalar_lea.vmem %s8, %s488
      %p490 = scmp.eq.s32.totalorder %s24, 0
      // Predicated region
      $region53: #{depth_loss_v3.1} parent=51 // pred_check
        %p491 = pneg %p490
      $region54: #{depth_loss_v3.1} parent=51 // pred_check_branch
        %493 = sbr.rel (%p491) target = $region56
      $region55: #{depth_loss_v3.1} parent=51 // pred_region
        %s494 = scalar_lea.smem [#allocation2], 0
        %495 = sst [smem:[%s494]] 0.0
        %s496 = scalar_lea.smem [#allocation2], 1
        %497 = sst [smem:[%s496]] 0.0
        %s498 = scalar_lea.smem [#allocation2], 2
        %499 = sst [smem:[%s498]] 0.0
        %s500 = scalar_lea.smem [#allocation2], 3
        %501 = sst [smem:[%s500]] 0.0
        %s502 = scalar_lea.smem [#allocation2], 4
        %503 = sst [smem:[%s502]] 0.0
        %s504 = scalar_lea.smem [#allocation2], 5
        %505 = sst [smem:[%s504]] 0.0
        %s506 = scalar_lea.smem [#allocation2], 6
        %507 = sst [smem:[%s506]] 0.0
        %v508 = vld [vmem:[%s474] sm:$0xff]
        %v509 = vld [vmem:[%s478] sm:$0xff]
        %vm510 = vcmp.gt.f32.partialorder %v509, 0.0
        %v511 = vsel %vm510, 1, 0
        %v512 = vcvt.s32.f32 %v511
        %513 = vadd.xlane.f32.xlu0 %v512
        %v514 = vpop.xlane.xlu0 %513
        %v515 = vrot.slane %v514, 4
        %v516 = vadd.f32 %v514, %v515
        %v517 = vrot.slane %v516, 2
        %v518 = vadd.f32 %v516, %v517
        %v519 = vrot.slane %v518, 1
        %v520 = vadd.f32 %v518, %v519
        %s521 = vtos %v520
        %s522 = smax.f32 %s521, 1.0
        %v523 = vadd.f32 %v508, 0.001
        %v524 = vlog2.pop %v523
        %v525 = vmul.f32 %v524, 0.6931472
        %v526 = vadd.f32 %v509, 0.001
        %v527 = vlog2.pop %v526
        %v528 = vmul.f32 %v527, 0.6931472
        %v529 = vsub.f32 %v525, %v528
        %v530 = vmul.f32 %v529, %v512
        %s531 = sld [smem:[#allocation2 + $0x4]]
        %v533 = vrot.slane %v530, 2
        %v535 = vsub.f32 %v530, %v533
        %v536 = vand.u32 2147483647, %v535
        %v538 = vrot.slane %v512, 2
        %v540 = vmul.f32 %v512, %v538
        %v541 = vmul.f32 %v536, %v540
        %vm542 = vcmask 1045504
        %v543 = vsel %vm542, %v541, 0.0
        %544 = vadd.xlane.f32.xlu0 %v543
        %v545 = vpop.xlane.xlu0 %544
        %v546 = vrot.slane %v545, 4
        %v547 = vadd.f32 %v545, %v546
        %v548 = vrot.slane %v547, 2
        %v549 = vadd.f32 %v547, %v548
        %v550 = vrot.slane %v549, 1
        %v551 = vadd.f32 %v549, %v550
        %s552 = vtos %v551
        %s553 = sadd.f32 %s552, 0.0
        %554 = vrot.lane.b32.xlu0 %v530, 126
        %v555 = vpop.permute.xlu0 %554
        %v557 = vsub.f32 %v530, %v555
        %v558 = vand.u32 2147483647, %v557
        %559 = vrot.lane.b32.xlu0 %v512, 126
        %v560 = vpop.permute.xlu0 %559
        %v562 = vmul.f32 %v512, %v560
        %v563 = vmul.f32 %v558, %v562
        %vm564 = vcmask 1031168
        %v565 = vsel %vm564, %v563, 0.0
        %566 = vadd.xlane.f32.xlu0 %v565
        %v567 = vpop.xlane.xlu0 %566
        %v568 = vrot.slane %v567, 4
        %v569 = vadd.f32 %v567, %v568
        %v570 = vrot.slane %v569, 2
        %v571 = vadd.f32 %v569, %v570
        %v572 = vrot.slane %v571, 1
        %v573 = vadd.f32 %v571, %v572
        %s574 = vtos %v573
        %s575 = sadd.f32 %s553, %s574
        %v576 = vstv %s522
        %v577 = vrcp.pop %v576
        %s578 = vtos %v577
        %s579 = smul.f32 %s575, %s578
        %s580 = sadd.f32 %s531, %s579
        %581 = sst [smem:[%s502]] %s580
        %v582 = vld [vmem:[%s482] sm:$0xff]
        %v583 = vld [vmem:[%s486] sm:$0xff]
        %vm584 = vcmp.gt.f32.partialorder %v583, 0.0
        %v585 = vsel %vm584, 1, 0
        %v586 = vcvt.s32.f32 %v585
        %587 = vadd.xlane.f32.xlu0 %v586
        %v588 = vpop.xlane.xlu0 %587
        %v589 = vrot.slane %v588, 4
        %v590 = vadd.f32 %v588, %v589
        %v591 = vrot.slane %v590, 2
        %v592 = vadd.f32 %v590, %v591
        %v593 = vrot.slane %v592, 1
        %v594 = vadd.f32 %v592, %v593
        %s595 = vtos %v594
        %s596 = smax.f32 %s595, 1.0
        %v597 = vadd.f32 %v582, 0.001
        %v598 = vlog2.pop %v597
        %v599 = vmul.f32 %v598, 0.6931472
        %v600 = vadd.f32 %v583, 0.001
        %v601 = vlog2.pop %v600
        %v602 = vmul.f32 %v601, 0.6931472
        %v603 = vsub.f32 %v599, %v602
        %v604 = vmul.f32 %v603, %v586
        %s605 = sld [smem:[#allocation2 + $0x4]]
        %v607 = vrot.slane %v604, 2
        %v609 = vsub.f32 %v604, %v607
        %v610 = vand.u32 2147483647, %v609
        %v612 = vrot.slane %v586, 2
        %v614 = vmul.f32 %v586, %v612
        %v615 = vmul.f32 %v610, %v614
        %v616 = vsel %vm542, %v615, 0.0
        %617 = vadd.xlane.f32.xlu0 %v616
        %v618 = vpop.xlane.xlu0 %617
        %v619 = vrot.slane %v618, 4
        %v620 = vadd.f32 %v618, %v619
        %v621 = vrot.slane %v620, 2
        %v622 = vadd.f32 %v620, %v621
        %v623 = vrot.slane %v622, 1
        %v624 = vadd.f32 %v622, %v623
        %s625 = vtos %v624
        %s626 = sadd.f32 %s625, 0.0
        %627 = vrot.lane.b32.xlu0 %v604, 126
        %v628 = vpop.permute.xlu0 %627
        %v630 = vsub.f32 %v604, %v628
        %v631 = vand.u32 2147483647, %v630
        %632 = vrot.lane.b32.xlu0 %v586, 126
        %v633 = vpop.permute.xlu0 %632
        %v635 = vmul.f32 %v586, %v633
        %v636 = vmul.f32 %v631, %v635
        %v637 = vsel %vm564, %v636, 0.0
        %638 = vadd.xlane.f32.xlu0 %v637
        %v639 = vpop.xlane.xlu0 %638
        %v640 = vrot.slane %v639, 4
        %v641 = vadd.f32 %v639, %v640
        %v642 = vrot.slane %v641, 2
        %v643 = vadd.f32 %v641, %v642
        %v644 = vrot.slane %v643, 1
        %v645 = vadd.f32 %v643, %v644
        %s646 = vtos %v645
        %s647 = sadd.f32 %s626, %s646
        %v648 = vstv %s596
        %v649 = vrcp.pop %v648
        %s650 = vtos %v649
        %s651 = smul.f32 %s647, %s650
        %s652 = sadd.f32 %s605, %s651
        %653 = sst [smem:[%s502]] %s652
      $region56: #{depth_loss_v3.1} parent=51 // pred_fallthru
        _
      %v654 = vld [vmem:[%s445] sm:$0xff]
      %v655 = vld [vmem:[%s445 + $0x8] sm:$0xff]
      %v656 = vld [vmem:[%s455] sm:$0xff]
      %v657 = vld [vmem:[%s455 + $0x8] sm:$0xff]
      %vm658 = vcmp.gt.f32.partialorder %v656, 0.0
      %vm659 = vcmp.gt.f32.partialorder %v657, 0.0
      %v660 = vsel %vm658, 1, 0
      %v661 = vsel %vm659, 1, 0
      %v662 = vcvt.s32.f32 %v660
      %v663 = vcvt.s32.f32 %v661
      %v664 = vmax.f32 %v654, 1e-05
      %v665 = vmax.f32 %v655, 1e-05
      %v666 = vlog2.pop %v664
      %v667 = vmul.f32 %v666, 0.6931472
      %v668 = vlog2.pop %v665
      %v669 = vmul.f32 %v668, 0.6931472
      %v670 = vmax.f32 %v656, 1e-05
      %v671 = vmax.f32 %v657, 1e-05
      %v672 = vlog2.pop %v670
      %v673 = vmul.f32 %v672, 0.6931472
      %v674 = vlog2.pop %v671
      %v675 = vmul.f32 %v674, 0.6931472
      %v676 = vsub.f32 %v667, %v673
      %v677 = vsub.f32 %v669, %v675
      %v678 = vmul.f32 %v676, %v662
      %v679 = vmul.f32 %v677, %v663
      %v680 = vadd.f32 %v654, 0.001
      %v681 = vadd.f32 %v655, 0.001
      %v682 = vlog2.pop %v680
      %v683 = vmul.f32 %v682, 0.6931472
      %v684 = vlog2.pop %v681
      %v685 = vmul.f32 %v684, 0.6931472
      %v686 = vadd.f32 %v656, 0.001
      %v687 = vadd.f32 %v657, 0.001
      %v688 = vlog2.pop %v686
      %v689 = vmul.f32 %v688, 0.6931472
      %v690 = vlog2.pop %v687
      %v691 = vmul.f32 %v690, 0.6931472
      %v692 = vsub.f32 %v683, %v689
      %v693 = vsub.f32 %v685, %v691
      %v694 = vmul.f32 %v692, %v662
      %v695 = vmul.f32 %v693, %v663
      %v696 = vld [vmem:[%s463] sm:$0xff]
      %v697 = vld [vmem:[%s470] sm:$0xff]
      %vm698 = vcmp.gt.f32.partialorder %v697, 0.0
      %v699 = vsel %vm698, 1, 0
      %v700 = vcvt.s32.f32 %v699
      %v701 = vadd.f32 %v696, 0.001
      %v702 = vlog2.pop %v701
      %v703 = vmul.f32 %v702, 0.6931472
      %v704 = vadd.f32 %v697, 0.001
      %v705 = vlog2.pop %v704
      %v706 = vmul.f32 %v705, 0.6931472
      %v707 = vsub.f32 %v703, %v706
      %v708 = vmul.f32 %v707, %v700
      %s709 = sld [smem:[#allocation2]]
      %vm710 = vcmask 130048
      %v711 = vsel %vm710, %v662, 0.0
      %v712 = vsel %vm710, %v663, 0.0
      %v713 = vadd.f32 %v711, %v712
      %714 = vadd.xlane.f32.xlu0 %v713
      %v715 = vpop.xlane.xlu0 %714
      %v716 = vrot.slane %v715, 4
      %v717 = vadd.f32 %v715, %v716
      %v718 = vrot.slane %v717, 2
      %v719 = vadd.f32 %v717, %v718
      %v720 = vrot.slane %v719, 1
      %v721 = vadd.f32 %v719, %v720
      %s722 = vtos %v721
      %s723 = sadd.f32 %s709, %s722
      %s724 = scalar_lea.smem [#allocation2], 0
      %725 = sst [smem:[%s724]] %s723
      %s726 = sld [smem:[#allocation2 + $0x1]]
      %v727 = vmul.f32 %v678, %v678
      %v728 = vmul.f32 %v679, %v679
      %v729 = vsel %vm710, %v727, 0.0
      %v730 = vsel %vm710, %v728, 0.0
      %v731 = vadd.f32 %v729, %v730
      %732 = vadd.xlane.f32.xlu0 %v731
      %v733 = vpop.xlane.xlu0 %732
      %v734 = vrot.slane %v733, 4
      %v735 = vadd.f32 %v733, %v734
      %v736 = vrot.slane %v735, 2
      %v737 = vadd.f32 %v735, %v736
      %v738 = vrot.slane %v737, 1
      %v739 = vadd.f32 %v737, %v738
      %s740 = vtos %v739
      %s741 = sadd.f32 %s726, %s740
      %s742 = scalar_lea.smem [#allocation2], 1
      %743 = sst [smem:[%s742]] %s741
      %s744 = sld [smem:[#allocation2 + $0x2]]
      %v745 = vsel %vm710, %v678, 0.0
      %v746 = vsel %vm710, %v679, 0.0
      %v747 = vadd.f32 %v745, %v746
      %748 = vadd.xlane.f32.xlu0 %v747
      %v749 = vpop.xlane.xlu0 %748
      %v750 = vrot.slane %v749, 4
      %v751 = vadd.f32 %v749, %v750
      %v752 = vrot.slane %v751, 2
      %v753 = vadd.f32 %v751, %v752
      %v754 = vrot.slane %v753, 1
      %v755 = vadd.f32 %v753, %v754
      %s756 = vtos %v755
      %s757 = sadd.f32 %s744, %s756
      %s758 = scalar_lea.smem [#allocation2], 2
      %759 = sst [smem:[%s758]] %s757
      %s760 = sld [smem:[#allocation2 + $0x3]]
      %vm763 = vcmask 1045504
      %v764 = vrot.slane %v694, 2
      %v765 = vrot.slane %v695, 2
      %v766 = vsel %vm763, %v764, %v765
      %v769 = vsub.f32 %v694, %v766
      %v770 = vsub.f32 %v695, %v765
      %v771 = vand.u32 2147483647, %v769
      %v772 = vand.u32 2147483647, %v770
      %v775 = vrot.slane %v662, 2
      %v776 = vrot.slane %v663, 2
      %v777 = vsel %vm763, %v775, %v776
      %v780 = vmul.f32 %v662, %v777
      %v781 = vmul.f32 %v663, %v776
      %v782 = vmul.f32 %v771, %v780
      %v783 = vmul.f32 %v772, %v781
      %v784 = vsel %vm710, %v782, 0.0
      %vm785 = vcmask 128000
      %v786 = vsel %vm785, %v783, 0.0
      %v787 = vadd.f32 %v784, %v786
      %788 = vadd.xlane.f32.xlu0 %v787
      %v789 = vpop.xlane.xlu0 %788
      %v790 = vrot.slane %v789, 4
      %v791 = vadd.f32 %v789, %v790
      %v792 = vrot.slane %v791, 2
      %v793 = vadd.f32 %v791, %v792
      %v794 = vrot.slane %v793, 1
      %v795 = vadd.f32 %v793, %v794
      %s796 = vtos %v795
      %s797 = sadd.f32 %s796, 0.0
      %798 = vrot.lane.b32.xlu0 %v694, 126
      %v799 = vpop.permute.xlu0 %798
      %800 = vrot.lane.b32.xlu0 %v695, 126
      %v801 = vpop.permute.xlu0 %800
      %v804 = vsub.f32 %v694, %v799
      %v805 = vsub.f32 %v695, %v801
      %v806 = vand.u32 2147483647, %v804
      %v807 = vand.u32 2147483647, %v805
      %808 = vrot.lane.b32.xlu0 %v662, 126
      %v809 = vpop.permute.xlu0 %808
      %810 = vrot.lane.b32.xlu0 %v663, 126
      %v811 = vpop.permute.xlu0 %810
      %v814 = vmul.f32 %v662, %v809
      %v815 = vmul.f32 %v663, %v811
      %v816 = vmul.f32 %v806, %v814
      %v817 = vmul.f32 %v807, %v815
      %vm818 = vcmask 113664
      %v819 = vsel %vm818, %v816, 0.0
      %v820 = vsel %vm818, %v817, 0.0
      %v821 = vadd.f32 %v819, %v820
      %822 = vadd.xlane.f32.xlu0 %v821
      %v823 = vpop.xlane.xlu0 %822
      %v824 = vrot.slane %v823, 4
      %v825 = vadd.f32 %v823, %v824
      %v826 = vrot.slane %v825, 2
      %v827 = vadd.f32 %v825, %v826
      %v828 = vrot.slane %v827, 1
      %v829 = vadd.f32 %v827, %v828
      %s830 = vtos %v829
      %s831 = sadd.f32 %s797, %s830
      %s832 = sadd.f32 %s760, %s831
      %s833 = scalar_lea.smem [#allocation2], 3
      %834 = sst [smem:[%s833]] %s832
      %s835 = sld [smem:[#allocation2 + $0x5]]
      %836 = vadd.xlane.f32.xlu0 %v700
      %v837 = vpop.xlane.xlu0 %836
      %v838 = vrot.slane %v837, 4
      %v839 = vadd.f32 %v837, %v838
      %v840 = vrot.slane %v839, 2
      %v841 = vadd.f32 %v839, %v840
      %v842 = vrot.slane %v841, 1
      %v843 = vadd.f32 %v841, %v842
      %s844 = vtos %v843
      %s845 = sadd.f32 %s835, %s844
      %s846 = scalar_lea.smem [#allocation2], 5
      %847 = sst [smem:[%s846]] %s845
      %s848 = sld [smem:[#allocation2 + $0x6]]
      %v850 = vrot.slane %v708, 2
      %v852 = vsub.f32 %v708, %v850
      %v853 = vand.u32 2147483647, %v852
      %v855 = vrot.slane %v700, 2
      %v857 = vmul.f32 %v700, %v855
      %v858 = vmul.f32 %v853, %v857
      %v859 = vsel %vm763, %v858, 0.0
      %860 = vadd.xlane.f32.xlu0 %v859
      %v861 = vpop.xlane.xlu0 %860
      %v862 = vrot.slane %v861, 4
      %v863 = vadd.f32 %v861, %v862
      %v864 = vrot.slane %v863, 2
      %v865 = vadd.f32 %v863, %v864
      %v866 = vrot.slane %v865, 1
      %v867 = vadd.f32 %v865, %v866
      %s868 = vtos %v867
      %s869 = sadd.f32 %s868, 0.0
      %870 = vrot.lane.b32.xlu0 %v708, 126
      %v871 = vpop.permute.xlu0 %870
      %v873 = vsub.f32 %v708, %v871
      %v874 = vand.u32 2147483647, %v873
      %875 = vrot.lane.b32.xlu0 %v700, 126
      %v876 = vpop.permute.xlu0 %875
      %v878 = vmul.f32 %v700, %v876
      %v879 = vmul.f32 %v874, %v878
      %vm880 = vcmask 1031168
      %v881 = vsel %vm880, %v879, 0.0
      %882 = vadd.xlane.f32.xlu0 %v881
      %v883 = vpop.xlane.xlu0 %882
      %v884 = vrot.slane %v883, 4
      %v885 = vadd.f32 %v883, %v884
      %v886 = vrot.slane %v885, 2
      %v887 = vadd.f32 %v885, %v886
      %v888 = vrot.slane %v887, 1
      %v889 = vadd.f32 %v887, %v888
      %s890 = vtos %v889
      %s891 = sadd.f32 %s869, %s890
      %s892 = sadd.f32 %s848, %s891
      %s893 = scalar_lea.smem [#allocation2], 6
      %894 = sst [smem:[%s893]] %s892
      // Predicated region
      $region57: #{depth_loss_v3.1} parent=51 // pred_check
        %p895 = pneg %p490
      $region58: #{depth_loss_v3.1} parent=51 // pred_check_branch
        %897 = sbr.rel (%p895) target = $region60
      $region59: #{depth_loss_v3.1} parent=51 // pred_region
        %s898 = sld [smem:[#allocation2]]
        %s899 = smax.f32 %s898, 1.0
        %s900 = sld [smem:[#allocation2 + $0x5]]
        %s901 = smax.f32 %s900, 1.0
        %s902 = sld [smem:[#allocation2 + $0x1]]
        %v903 = vstv %s899
        %v904 = vrcp.pop %v903
        %s905 = vtos %v904
        %s906 = smul.f32 %s902, %s905
        %s907 = sld [smem:[#allocation2 + $0x2]]
        %s908 = smul.f32 %s907, %s907
        %s909 = smul.f32 %s899, %s899
        %v910 = vstv %s909
        %v911 = vrcp.pop %v910
        %s912 = vtos %v911
        %s913 = smul.f32 %s908, %s912
        %s914 = smul.f32 %s913, 0.85
        %s915 = ssub.f32 %s906, %s914
        %s916 = sld [smem:[#allocation2 + $0x3]]
        %v917 = vstv %s899
        %v918 = vrcp.pop %v917
        %s919 = vtos %v918
        %s920 = smul.f32 %s916, %s919
        %s921 = sld [smem:[#allocation2 + $0x6]]
        %v922 = vstv %s901
        %v923 = vrcp.pop %v922
        %s924 = vtos %v923
        %s925 = smul.f32 %s921, %s924
        %s926 = sadd.f32 %s920, %s925
        %s927 = sld [smem:[#allocation2 + $0x4]]
        %s928 = sadd.f32 %s926, %s927
        %v929 = vlaneseq
        %v930 = vand.u32 %v929, 127
        %vm931 = vcmp.eq.s32.totalorder %v930, 0
        %vm932 = vcmp.eq.s32.totalorder %v930, 1
        %v933 = vstv %s928
        %v934 = vsel %vm932, %v933, 0.0
        %v935 = vstv %s915
        %v936 = vsel %vm931, %v935, %v934
        %937 = vst [vmem:[%s489] sm:$0x1] %v936
      $region60: #{depth_loss_v3.1} parent=51 // pred_fallthru
        _
      %p938 = scmp.lt.s32.totalorder %s23, 1
      %s939 = scalar_select %p938, %s23, 1
      %s940 = scalar_lea.vmem %s8, %s939
      // Predicated region
      $region61: #{depth_loss_v3.1} parent=51 // pred_check
        %p941 = pneg %p265
      $region62: #{depth_loss_v3.1} parent=51 // pred_check_branch
        %943 = sbr.rel (%p941) target = $region64
      $region63: #{depth_loss_v3.1} parent=51 // pred_region
        _
      $region64: #{depth_loss_v3.1} parent=51 // pred_fallthru
        _
    $region52: #{depth_loss_v3.1} parent=5 // pred_fallthru
      _
    %p944 = scmp.le.s32.totalorder 2, %s14
    // Predicated region
    $region65: #{depth_loss_v3.1} parent=5 // pred_check
      %p945 = pneg %p944
    $region66: #{depth_loss_v3.1} parent=5 // pred_check_branch
      %947 = sbr.rel (%p945) target = $region68
    $region67: #{depth_loss_v3.1} parent=5 // pred_region
      %s948 = ssub.s32 %s14, 2
      // Predicated region
      $region69: #{depth_loss_v3.1} parent=67 // pred_check
        %p949 = pneg %p271
      $region70: #{depth_loss_v3.1} parent=67 // pred_check_branch
        %951 = sbr.rel (%p949) target = $region72
      $region71: #{depth_loss_v3.1} parent=67 // pred_region
        %p952 = scmp.lt.s32.totalorder %s25, 1
        %s953 = scalar_select %p952, %s25, 1
        %s954 = scalar_lea.vmem %s8, %s953
      $region72: #{depth_loss_v3.1} parent=67 // pred_fallthru
        _
    $region68: #{depth_loss_v3.1} parent=5 // pred_fallthru
      _
  $region6: #{depth_loss_v3.1} parent=0 // loop_footer
    %s18 = sadd.s32 1, %s14
  $region7: #{depth_loss_v3.1} parent=0 // loop_footer_branch
    %13 = sbr.rel target = $region3
  $region8: #{depth_loss_v3.1} parent=0 // loop_exit
    _

</llo_original>
